<compile_context>
chip_gen: v7x
topology: tpu7x:2x2x1
jax: 0.10.0
libtpu: 0.0.40
codegen_flags: <defaults>
</compile_context>

<pallas_src>
import functools

import jax
import jax.numpy as jnp
from jax.experimental import pallas as pl
from jax.experimental.pallas import tpu as pltpu


def _round_up(x, m):
    return ((x + m - 1) // m) * m


def _cdiv(a, b):
    return -(-a // b)


# Tile-size constants (sized so 2x-buffered blocks stay well inside v7x's
# 32 MiB default scoped-VMEM limit; multiples of 256 feed v6e/v7x's 256x256
# MXU, and are fine on v5e's 128-granular MXU).
TM_MAX = 256   # output-row tile (sublane axis)
TK_MAX = 512   # conv reduction (im2col K) tile


def _k_tiles(k0):
    """Choose (tk, Kp) for the conv reduction axis (static, used at init)."""
    k128 = _round_up(k0, 128)
    nk = _cdiv(k128, TK_MAX)
    tk = _round_up(_cdiv(k128, nk), 128)
    return tk, nk * tk


def _m_tiles(m):
    """Choose (tm, Mp) for the output-row axis."""
    tm = min(TM_MAX, _round_up(m, 8))
    return tm, _round_up(m, tm)


# ---------------------------------------------------------------------------
# Pallas kernels
# ---------------------------------------------------------------------------
def _nin_block_kernel(a_ref, w0_ref, b0_ref, w1_ref, b1_ref, w2_ref, b2_ref,
                      o_ref, acc_ref):
    """One nin_block on a (tm, Cp) output tile.

    Grid = (M tiles, K tiles).  The spatial conv accumulates over the K axis
    into an f32 VMEM scratch; at the last K step the two 1x1 convs + bias +
    ReLU are applied to the resident tile and the result is stored (bf16).
    """
    k = pl.program_id(1)

    @pl.when(k == 0)
    def _():
        acc_ref[...] = jnp.zeros_like(acc_ref)

    acc_ref[...] += jnp.dot(a_ref[...], w0_ref[...],
                            preferred_element_type=jnp.float32)

    @pl.when(k == pl.num_programs(1) - 1)
    def _():
        h = jnp.maximum(acc_ref[...] + b0_ref[...], 0.0)
        h = jnp.dot(h.astype(jnp.bfloat16), w1_ref[...],
                    preferred_element_type=jnp.float32)
        h = jnp.maximum(h + b1_ref[...], 0.0)
        h = jnp.dot(h.astype(jnp.bfloat16), w2_ref[...],
                    preferred_element_type=jnp.float32)
        h = jnp.maximum(h + b2_ref[...], 0.0)
        o_ref[...] = h.astype(o_ref.dtype)


def _nin_block_gap_kernel(a_ref, w0_ref, b0_ref, w1_ref, b1_ref, w2_ref,
                          b2_ref, o_ref, *, ohw):
    """Last nin_block + fused global average pool; grid = (batch,)."""
    h = jnp.dot(a_ref[...], w0_ref[...], preferred_element_type=jnp.float32)
    h = jnp.maximum(h + b0_ref[...], 0.0)
    h = jnp.dot(h.astype(jnp.bfloat16), w1_ref[...],
                preferred_element_type=jnp.float32)
    h = jnp.maximum(h + b1_ref[...], 0.0)
    h = jnp.dot(h.astype(jnp.bfloat16), w2_ref[...],
                preferred_element_type=jnp.float32)
    h = jnp.maximum(h + b2_ref[...], 0.0)
    # Masked mean over the valid spatial rows (padded rows are excluded).
    rows = jax.lax.broadcasted_iota(jnp.int32, h.shape, 0)
    h = jnp.where(rows < ohw, h, 0.0)
    mean = jnp.sum(h, axis=0, keepdims=True) * (1.0 / ohw)   # (1, Cp)
    o_ref[...] = jnp.broadcast_to(mean, o_ref.shape)


def _max_reduce_kernel(x_ref, o_ref):
    # x_ref: (KK, M, C) window-stacked values; reduce over the window axis.
    o_ref[...] = jnp.max(x_ref[...], axis=0)


# ---------------------------------------------------------------------------
# pallas_call wrappers
# ---------------------------------------------------------------------------
def _fused_block_matmul(a_p, w0, b0, w1, b1, w2, b2, tm, tk, out_dtype):
    """relu(relu(relu(A@W0+b0)@W1+b1)@W2+b2) with a tiled (M, K) grid."""
    mp, kp = a_p.shape
    cp = w0.shape[1]
    grid = (mp // tm, kp // tk)
    return pl.pallas_call(
        _nin_block_kernel,
        out_shape=jax.ShapeDtypeStruct((mp, cp), out_dtype),
        grid_spec=pltpu.PrefetchScalarGridSpec(
            num_scalar_prefetch=0,
            grid=grid,
            in_specs=[
                pl.BlockSpec((tm, tk), lambda i, k: (i, k)),   # A (im2col)
                pl.BlockSpec((tk, cp), lambda i, k: (k, 0)),   # W0
                pl.BlockSpec((1, cp), lambda i, k: (0, 0)),    # b0
                pl.BlockSpec((cp, cp), lambda i, k: (0, 0)),   # W1 (1x1)
                pl.BlockSpec((1, cp), lambda i, k: (0, 0)),    # b1
                pl.BlockSpec((cp, cp), lambda i, k: (0, 0)),   # W2 (1x1)
                pl.BlockSpec((1, cp), lambda i, k: (0, 0)),    # b2
            ],
            out_specs=pl.BlockSpec((tm, cp), lambda i, k: (i, 0)),
            scratch_shapes=[pltpu.VMEM((tm, cp), jnp.float32)],
        ),
        compiler_params=pltpu.CompilerParams(
            dimension_semantics=("parallel", "arbitrary")),
    )(a_p, w0, b0, w1, b1, w2, b2)


def _fused_block_gap(a_p, w0, b0, w1, b1, w2, b2, n, ohwp, ohw):
    """Last block + global average pool, gridded over the batch."""
    kp = a_p.shape[1]
    cp = w0.shape[1]
    return pl.pallas_call(
        functools.partial(_nin_block_gap_kernel, ohw=ohw),
        out_shape=jax.ShapeDtypeStruct((n * 8, cp), jnp.float32),
        grid_spec=pltpu.PrefetchScalarGridSpec(
            num_scalar_prefetch=0,
            grid=(n,),
            in_specs=[
                pl.BlockSpec((ohwp, kp), lambda b: (b, 0)),    # A per image
                pl.BlockSpec((kp, cp), lambda b: (0, 0)),      # W0
                pl.BlockSpec((1, cp), lambda b: (0, 0)),       # b0
                pl.BlockSpec((cp, cp), lambda b: (0, 0)),      # W1
                pl.BlockSpec((1, cp), lambda b: (0, 0)),       # b1
                pl.BlockSpec((cp, cp), lambda b: (0, 0)),      # W2
                pl.BlockSpec((1, cp), lambda b: (0, 0)),       # b2
            ],
            out_specs=pl.BlockSpec((8, cp), lambda b: (b, 0)),
        ),
        compiler_params=pltpu.CompilerParams(
            dimension_semantics=("parallel",)),
    )(a_p, w0, b0, w1, b1, w2, b2)


# ---------------------------------------------------------------------------
# Glue: im2col (spatial convs only — 1x1 convs never touch it) and pooling
# ---------------------------------------------------------------------------
def _im2col(x, ksize, stride, padding):
    """x: (N,H,W,C) -> ((N*OH*OW, KH*KW*C), OH, OW); row order (kh, kw, c)."""
    n, h, w, c = x.shape
    xp = jnp.pad(x, ((0, 0), (padding, padding), (padding, padding), (0, 0)))
    oh = (h + 2 * padding - ksize) // stride + 1
    ow = (w + 2 * padding - ksize) // stride + 1
    # TODO(synk): move the (kh, kw) loop into the kernel grid (offsetting into
    # the padded NHWC input via index_map) to avoid materializing im2col in HBM.
    cols = []
    for i in range(ksize):
        for j in range(ksize):
            sl = jax.lax.slice(
                xp, (0, i, j, 0),
                (n, i + stride * (oh - 1) + 1, j + stride * (ow - 1) + 1, c),
                (1, stride, stride, 1))
            cols.append(sl)
    patches = jnp.stack(cols, axis=3)            # (N, OH, OW, KK, C)
    return patches.reshape(n * oh * ow, ksize * ksize * c), oh, ow


def nin_block_forward(x, blk):
    """Fused nin_block (conv + 2x 1x1 + ReLUs) -> (N, OH, OW, Cout) bf16."""
    n = x.shape[0]
    a, oh, ow = _im2col(x, blk["k"], blk["stride"], blk["pad"])
    m, k0 = a.shape
    tm, mp = _m_tiles(m)
    kp = blk["w0"].shape[0]
    a_p = jnp.pad(a, ((0, mp - m), (0, kp - k0)))
    out = _fused_block_matmul(a_p, blk["w0"], blk["b0"], blk["w1"], blk["b1"],
                              blk["w2"], blk["b2"], tm, blk["tk"],
                              jnp.bfloat16)
    return out[:m, :blk["cout"]].reshape(n, oh, ow, blk["cout"])


def nin_block_gap_forward(x, blk, num_classes):
    """Last nin_block + AdaptiveAvgPool2d((1,1)) + flatten -> (N, classes)."""
    n = x.shape[0]
    a, oh, ow = _im2col(x, blk["k"], blk["stride"], blk["pad"])
    ohw = oh * ow
    ohwp = _round_up(ohw, 16)                    # bf16 sublane packing
    k0 = a.shape[1]
    kp = blk["w0"].shape[0]
    a_p = jnp.pad(a.reshape(n, ohw, k0),
                  ((0, 0), (0, ohwp - ohw), (0, kp - k0)))
    a_p = a_p.reshape(n * ohwp, kp)
    out = _fused_block_gap(a_p, blk["w0"], blk["b0"], blk["w1"], blk["b1"],
                           blk["w2"], blk["b2"], n, ohwp, ohw)
    return out.reshape(n, 8, -1)[:, 0, :num_classes]


def maxpool2d(x, ksize=3, stride=2):
    """MaxPool2d(3, 2): window slices stacked in JAX, max-reduce in Pallas."""
    # TODO(synk): read the pooled input directly in-kernel (strided pl.ds
    # window slices) to avoid the 9x window-stack HBM amplification.
    n, h, w, c = x.shape
    oh = (h - ksize) // stride + 1
    ow = (w - ksize) // stride + 1
    wins = []
    for i in range(ksize):
        for j in range(ksize):
            sl = jax.lax.slice(
                x, (0, i, j, 0),
                (n, i + stride * (oh - 1) + 1, j + stride * (ow - 1) + 1, c),
                (1, stride, stride, 1))
            wins.append(sl.reshape(n * oh * ow, c))
    stacked = jnp.stack(wins, axis=0)            # (KK, M, C)
    kk, m, _ = stacked.shape
    mp, cp = _round_up(m, 8), _round_up(c, 128)
    xp = jnp.full((kk, mp, cp), -jnp.inf, x.dtype).at[:, :m, :c].set(stacked)
    out = pl.pallas_call(
        _max_reduce_kernel,
        out_shape=jax.ShapeDtypeStruct((mp, cp), x.dtype),
        in_specs=[pl.BlockSpec(memory_space=pltpu.MemorySpace.VMEM)],
        out_specs=pl.BlockSpec(memory_space=pltpu.MemorySpace.VMEM),
    )(xp)
    return out[:m, :c].reshape(n, oh, ow, c)


# ---------------------------------------------------------------------------
# Parameter construction (weights pre-reshaped + pre-padded, bf16) + forward
# ---------------------------------------------------------------------------
def _pad_conv_weights(key, ksize, cin, cout, kp, cp):
    fan_out = ksize * ksize * cout
    std = (2.0 / fan_out) ** 0.5                 # kaiming normal (relu)
    w = jax.random.normal(key, (ksize, ksize, cin, cout), jnp.float32) * std
    w2d = w.reshape(ksize * ksize * cin, cout)
    w_p = jnp.zeros((kp, cp), jnp.float32).at[:ksize * ksize * cin, :cout].set(w2d)
    b_p = jnp.zeros((1, cp), jnp.float32)        # conv bias init = 0
    return w_p.astype(jnp.bfloat16), b_p


def init_nin_params(key, num_classes=10):
    # (cin, cout, kernel, stride, pad) for the first conv of each nin_block
    cfgs = [(3, 96, 11, 4, 0), (96, 256, 5, 1, 2), (256, 384, 3, 1, 1),
            (384, num_classes, 3, 1, 1)]
    params = []
    for idx, (cin, cout, ksize, stride, pad) in enumerate(cfgs):
        key, kc, k1, k2 = jax.random.split(key, 4)
        cp = _round_up(cout, 128)
        k0 = ksize * ksize * cin
        if idx == len(cfgs) - 1:                 # last block: full-K kernel
            tk, kp = None, _round_up(k0, 128)
        else:
            tk, kp = _k_tiles(k0)
        w0, b0 = _pad_conv_weights(kc, ksize, cin, cout, kp, cp)
        w1, b1 = _pad_conv_weights(k1, 1, cout, cout, cp, cp)
        w2, b2 = _pad_conv_weights(k2, 1, cout, cout, cp, cp)
        params.append(dict(w0=w0, b0=b0, w1=w1, b1=b1, w2=w2, b2=b2,
                           k=ksize, stride=stride, pad=pad,
                           cout=cout, tk=tk))
    return params


def nin_forward(x_nchw, params, num_classes):
    x = jnp.transpose(x_nchw, (0, 2, 3, 1)).astype(jnp.bfloat16)  # NCHW->NHWC
    x = nin_block_forward(x, params[0])
    x = maxpool2d(x)
    x = nin_block_forward(x, params[1])
    x = maxpool2d(x)
    x = nin_block_forward(x, params[2])
    x = maxpool2d(x)
    # nn.Dropout(0.5): inference-mode identity (deterministic kernel)
    x = nin_block_gap_forward(x, params[3], num_classes)  # conv block + GAP
    return x


if __name__ == "__main__":
    key = jax.random.PRNGKey(0)
    k_in, k_par = jax.random.split(key)

    NUM_CLASSES = 10
    # Smallest spatial size that survives the stride/pool chain:
    # 67 ->(conv11/4) 15 ->(pool) 7 ->(pool) 3 ->(pool) 1 ->(avgpool) 1
    x = jax.random.normal(k_in, (2, 3, 67, 67), jnp.float32)  # NCHW like PyTorch

    params = init_nin_params(k_par, num_classes=NUM_CLASSES)
    out = nin_forward(x, params, NUM_CLASSES)
    out = jax.block_until_ready(out)

    assert out.shape == (2, NUM_CLASSES), out.shape
    assert bool(jnp.all(jnp.isfinite(out)))
    print("KERNEL_OK")
</pallas_src>

<mosaic_0001>
module attributes {stable_mosaic.version = 11 : i64} {
  func.func @_nin_block_kernel(%arg0: i32, %arg1: i32, %arg2: memref<256x384xbf16, #tpu.memory_space<vmem>>, %arg3: memref<384x128xbf16, #tpu.memory_space<vmem>>, %arg4: memref<1x128xf32, #tpu.memory_space<vmem>>, %arg5: memref<128x128xbf16, #tpu.memory_space<vmem>>, %arg6: memref<1x128xf32, #tpu.memory_space<vmem>>, %arg7: memref<128x128xbf16, #tpu.memory_space<vmem>>, %arg8: memref<1x128xf32, #tpu.memory_space<vmem>>, %arg9: memref<256x128xbf16, #tpu.memory_space<vmem>>, %arg10: memref<256x128xf32, #tpu.memory_space<vmem>>) attributes {dimension_semantics = [#tpu.dimension_semantics<parallel>, #tpu.dimension_semantics<arbitrary>], iteration_bounds = array<i64: 2, 1>, scalar_prefetch = 0 : i64, scratch_operands = 1 : i64, tpu.core_type = #tpu.core_type<tc>, window_params = [{transform_indices = @transform_0, window_bounds = array<i64: 256, 384>}, {transform_indices = @transform_1, window_bounds = array<i64: 384, 128>}, {pipeline_mode = #tpu.pipeline_mode<synchronous>, transform_indices = @transform_2, window_bounds = array<i64: 1, 128>}, {pipeline_mode = #tpu.pipeline_mode<synchronous>, transform_indices = @transform_3, window_bounds = array<i64: 128, 128>}, {pipeline_mode = #tpu.pipeline_mode<synchronous>, transform_indices = @transform_4, window_bounds = array<i64: 1, 128>}, {pipeline_mode = #tpu.pipeline_mode<synchronous>, transform_indices = @transform_5, window_bounds = array<i64: 128, 128>}, {pipeline_mode = #tpu.pipeline_mode<synchronous>, transform_indices = @transform_6, window_bounds = array<i64: 1, 128>}, {transform_indices = @transform_7, window_bounds = array<i64: 256, 128>}]} {
    %c0_i32 = arith.constant 0 : i32
    %0 = arith.cmpi eq, %arg1, %c0_i32 : i32
    %1 = arith.extui %0 : i1 to i32
    %c0_i32_0 = arith.constant 0 : i32
    %2 = arith.cmpi ne, %1, %c0_i32_0 : i32
    scf.if %2 {
      %cst_10 = arith.constant 0.000000e+00 : f32
      %12 = vector.broadcast %cst_10 : f32 to vector<256x128xf32>
      %c0_11 = arith.constant 0 : index
      %c0_12 = arith.constant 0 : index
      %13 = vector.load %arg10[%c0_11, %c0_12] : memref<256x128xf32, #tpu.memory_space<vmem>>, vector<256x128xf32>
      tpu.vector_store %arg10[%c0_11, %c0_12], %12 {strides = array<i32>} : memref<256x128xf32, #tpu.memory_space<vmem>>, vector<256x128xf32>,
    } else {
    }
    %c0 = arith.constant 0 : index
    %c0_1 = arith.constant 0 : index
    %3 = vector.load %arg10[%c0, %c0_1] : memref<256x128xf32, #tpu.memory_space<vmem>>, vector<256x128xf32>
    %c0_2 = arith.constant 0 : index
    %c0_3 = arith.constant 0 : index
    %4 = vector.load %arg2[%c0_2, %c0_3] : memref<256x384xbf16, #tpu.memory_space<vmem>>, vector<256x384xbf16>
    %c0_4 = arith.constant 0 : index
    %c0_5 = arith.constant 0 : index
    %5 = vector.load %arg3[%c0_4, %c0_5] : memref<384x128xbf16, #tpu.memory_space<vmem>>, vector<384x128xbf16>
    %cst = arith.constant dense<0.000000e+00> : vector<256x128xf32>
    %6 = tpu.matmul %4, %5, %cst {dimension_numbers = #tpu.dot_dimension_numbers<[1], [0], [0], [1], [0, 0, 1, 1], [], []>} : vector<256x384xbf16>, vector<384x128xbf16>, vector<256x128xf32> -> vector<256x128xf32>
    %7 = arith.addf %3, %6 : vector<256x128xf32>
    %c0_6 = arith.constant 0 : index
    %c0_7 = arith.constant 0 : index
    %8 = vector.load %arg10[%c0_6, %c0_7] : memref<256x128xf32, #tpu.memory_space<vmem>>, vector<256x128xf32>
    tpu.vector_store %arg10[%c0_6, %c0_7], %7 {strides = array<i32>} : memref<256x128xf32, #tpu.memory_space<vmem>>, vector<256x128xf32>,
    %c0_i32_8 = arith.constant 0 : i32
    %9 = arith.cmpi eq, %arg1, %c0_i32_8 : i32
    %10 = arith.extui %9 : i1 to i32
    %c0_i32_9 = arith.constant 0 : i32
    %11 = arith.cmpi ne, %10, %c0_i32_9 : i32
    scf.if %11 {
      %c0_10 = arith.constant 0 : index
      %c0_11 = arith.constant 0 : index
      %12 = vector.load %arg10[%c0_10, %c0_11] : memref<256x128xf32, #tpu.memory_space<vmem>>, vector<256x128xf32>
      %c0_12 = arith.constant 0 : index
      %c0_13 = arith.constant 0 : index
      %13 = vector.load %arg4[%c0_12, %c0_13] : memref<1x128xf32, #tpu.memory_space<vmem>>, vector<1x128xf32>
      %14 = vector.broadcast %13 : vector<1x128xf32> to vector<256x128xf32>
      %15 = arith.addf %12, %14 : vector<256x128xf32>
      %cst_14 = arith.constant 0.000000e+00 : f32
      %16 = vector.broadcast %cst_14 : f32 to vector<256x128xf32>
      %17 = arith.maximumf %15, %16 : vector<256x128xf32>
      %18 = arith.truncf %17 : vector<256x128xf32> to vector<256x128xbf16>
      %c0_15 = arith.constant 0 : index
      %c0_16 = arith.constant 0 : index
      %19 = vector.load %arg5[%c0_15, %c0_16] : memref<128x128xbf16, #tpu.memory_space<vmem>>, vector<128x128xbf16>
      %cst_17 = arith.constant dense<0.000000e+00> : vector<256x128xf32>
      %20 = tpu.matmul %18, %19, %cst_17 {dimension_numbers = #tpu.dot_dimension_numbers<[1], [0], [0], [1], [0, 0, 1, 1], [], []>} : vector<256x128xbf16>, vector<128x128xbf16>, vector<256x128xf32> -> vector<256x128xf32>
      %c0_18 = arith.constant 0 : index
      %c0_19 = arith.constant 0 : index
      %21 = vector.load %arg6[%c0_18, %c0_19] : memref<1x128xf32, #tpu.memory_space<vmem>>, vector<1x128xf32>
      %22 = vector.broadcast %21 : vector<1x128xf32> to vector<256x128xf32>
      %23 = arith.addf %20, %22 : vector<256x128xf32>
      %cst_20 = arith.constant 0.000000e+00 : f32
      %24 = vector.broadcast %cst_20 : f32 to vector<256x128xf32>
      %25 = arith.maximumf %23, %24 : vector<256x128xf32>
      %26 = arith.truncf %25 : vector<256x128xf32> to vector<256x128xbf16>
      %c0_21 = arith.constant 0 : index
      %c0_22 = arith.constant 0 : index
      %27 = vector.load %arg7[%c0_21, %c0_22] : memref<128x128xbf16, #tpu.memory_space<vmem>>, vector<128x128xbf16>
      %cst_23 = arith.constant dense<0.000000e+00> : vector<256x128xf32>
      %28 = tpu.matmul %26, %27, %cst_23 {dimension_numbers = #tpu.dot_dimension_numbers<[1], [0], [0], [1], [0, 0, 1, 1], [], []>} : vector<256x128xbf16>, vector<128x128xbf16>, vector<256x128xf32> -> vector<256x128xf32>
      %c0_24 = arith.constant 0 : index
      %c0_25 = arith.constant 0 : index
      %29 = vector.load %arg8[%c0_24, %c0_25] : memref<1x128xf32, #tpu.memory_space<vmem>>, vector<1x128xf32>
      %30 = vector.broadcast %29 : vector<1x128xf32> to vector<256x128xf32>
      %31 = arith.addf %28, %30 : vector<256x128xf32>
      %cst_26 = arith.constant 0.000000e+00 : f32
      %32 = vector.broadcast %cst_26 : f32 to vector<256x128xf32>
      %33 = arith.maximumf %31, %32 : vector<256x128xf32>
      %34 = arith.truncf %33 : vector<256x128xf32> to vector<256x128xbf16>
      %c0_27 = arith.constant 0 : index
      %c0_28 = arith.constant 0 : index
      %35 = vector.load %arg9[%c0_27, %c0_28] : memref<256x128xbf16, #tpu.memory_space<vmem>>, vector<256x128xbf16>
      tpu.vector_store %arg9[%c0_27, %c0_28], %34 {strides = array<i32>} : memref<256x128xbf16, #tpu.memory_space<vmem>>, vector<256x128xbf16>,
    } else {
    }
    return
  }
  func.func @transform_0(%arg0: i32, %arg1: i32) -> (i32, i32) {
    %c0_i32 = arith.constant 0 : i32
    return %arg0, %arg1 : i32, i32
  }
  func.func @transform_1(%arg0: i32, %arg1: i32) -> (i32, i32) {
    %c0_i32 = arith.constant 0 : i32
    %c0_i32_0 = arith.constant 0 : i32
    return %arg1, %c0_i32 : i32, i32
  }
  func.func @transform_2(%arg0: i32, %arg1: i32) -> (i32, i32) {
    %c0_i32 = arith.constant 0 : i32
    %c0_i32_0 = arith.constant 0 : i32
    %c0_i32_1 = arith.constant 0 : i32
    return %c0_i32, %c0_i32_0 : i32, i32
  }
  func.func @transform_3(%arg0: i32, %arg1: i32) -> (i32, i32) {
    %c0_i32 = arith.constant 0 : i32
    %c0_i32_0 = arith.constant 0 : i32
    %c0_i32_1 = arith.constant 0 : i32
    return %c0_i32, %c0_i32_0 : i32, i32
  }
  func.func @transform_4(%arg0: i32, %arg1: i32) -> (i32, i32) {
    %c0_i32 = arith.constant 0 : i32
    %c0_i32_0 = arith.constant 0 : i32
    %c0_i32_1 = arith.constant 0 : i32
    return %c0_i32, %c0_i32_0 : i32, i32
  }
  func.func @transform_5(%arg0: i32, %arg1: i32) -> (i32, i32) {
    %c0_i32 = arith.constant 0 : i32
    %c0_i32_0 = arith.constant 0 : i32
    %c0_i32_1 = arith.constant 0 : i32
    return %c0_i32, %c0_i32_0 : i32, i32
  }
  func.func @transform_6(%arg0: i32, %arg1: i32) -> (i32, i32) {
    %c0_i32 = arith.constant 0 : i32
    %c0_i32_0 = arith.constant 0 : i32
    %c0_i32_1 = arith.constant 0 : i32
    return %c0_i32, %c0_i32_0 : i32, i32
  }
  func.func @transform_7(%arg0: i32, %arg1: i32) -> (i32, i32) {
    %c0_i32 = arith.constant 0 : i32
    %c0_i32_0 = arith.constant 0 : i32
    return %arg0, %c0_i32 : i32, i32
  }
}

</mosaic_0001>

<llo_original>
// kernel: tpu_custom_call.1
$region0: #{tpu_custom_call.1}
  #allocation0 [shape = 'u32[]', space=smem, size = 0x4, offset = 0x4, fixed_abs, tag = 'smem constant byte address 0x4 - core index']
  #allocation1 [shape = 'u32[144,128]{1,0:T(1,128)}', space=vmem, size = 0x12000, scoped, tag = 'internal scratch']
  #allocation2 [shape = 'f32[256,128]{1,0:T(8,128)}', space=vmem, size = 0x20000, scoped, tag = 'scratch operand']
  %s0 = inlined_call_operand.hbm [shape: bf16[512,384], index: 0, kind: input, shape index: {}]
  %s1 = inlined_call_operand.hbm [shape: bf16[384,128], index: 1, kind: input, shape index: {}]
  %s2 = inlined_call_operand.vmem [shape: f32[1,128], index: 2, kind: input, shape index: {}]
  %s3 = inlined_call_operand.hbm [shape: bf16[128,128], index: 3, kind: input, shape index: {}]
  %s4 = inlined_call_operand.vmem [shape: f32[1,128], index: 4, kind: input, shape index: {}]
  %s5 = inlined_call_operand.hbm [shape: bf16[128,128], index: 5, kind: input, shape index: {}]
  %s6 = inlined_call_operand.vmem [shape: f32[1,128], index: 6, kind: input, shape index: {}]
  %s7 = inlined_call_operand.hbm [shape: bf16[512,128], index: 7, kind: output, shape index: {}]
  %s8 = sld [smem:[#allocation0]]
  $region85: #{tpu_custom_call.1} parent=0
    _
  %s10 = ssub.s32 1, %s8
  %s11 = scalar_select 0, %s10, %s8
  $region1: #{tpu_custom_call.1} parent=0
    #allocation3 [shape = 'u8[393216]{0}', space=vmem, size = 0x60000, scoped, tag = 'input window, operand 0']
    #allocation4 [shape = 's32[2]{0}', space=sflag, size = 0x8, scoped, tag = 'scoped memory for tpu_custom_call.1']
    #allocation5 [shape = 's32[2]{0}', space=sflag, size = 0x8, scoped, tag = 'scoped memory for tpu_custom_call.1']
    #allocation6 [shape = 'u8[98304]{0}', space=vmem, size = 0x18000, scoped, tag = 'input window, operand 1, single buffered']
    #allocation7 [shape = 's32[1]{0}', space=sflag, size = 0x4, scoped, tag = 'scoped memory for tpu_custom_call.1']
    #allocation8 [shape = 'u8[32768]{0}', space=vmem, size = 0x8000, scoped, tag = 'input window, operand 3, single buffered']
    #allocation9 [shape = 'u8[32768]{0}', space=vmem, size = 0x8000, scoped, tag = 'input window, operand 5, single buffered']
    #allocation10 [shape = 's32[1]{0}', space=sflag, size = 0x4, scoped, tag = 'scoped memory for tpu_custom_call.1']
    #allocation11 [shape = 'u8[131072]{0}', space=vmem, size = 0x20000, scoped, tag = 'output window, operand 0']
    %12 = vsyncpa [#allocation4], 0
    %s13 = scalar_lea.sflag [#allocation4], 1
    %14 = vsyncpa %s13, 0
    %15 = vsyncpa [#allocation7], 0
    %16 = vsyncpa [#allocation10], 0
    %17 = vsyncpa [#allocation5], 0
    %s18 = scalar_lea.sflag [#allocation5], 1
    %19 = vsyncpa %s18, 0
    loop: start=0, step=1, limit=4
    $region2: #{tpu_custom_call.1} parent=1 // loop_pre_header
      _
    $region3: #{tpu_custom_call.1} parent=1 // loop_header
      %s21 = sphi 0, %s25
      %p22 = scmp.ge.s32.totalorder %s21, 4
      %s28 = sphi 0, %s40
      %s29 = sphi 0, %s36
      %s30 = sphi 0, %s28
      %s31 = sphi 0, %s29
      %s32 = sphi 0, %s30
      %s33 = sphi 0, %s31
      %s45 = sphi 0, %s47
      %s48 = sphi 0, %s45
      %s49 = sphi 0, %s48
      %s65 = sphi 0, %s49
      %s71 = sphi 0, %s73
      %s74 = sphi 0, %s71
      %s75 = sphi 0, %s74
      %s91 = sphi 0, %s75
      %s95 = sphi 0, %s95
      %s97 = sphi 0, %s95
      %s98 = sphi 0, %s97
      %s112 = sphi 0, %s98
      %s116 = sphi 0, %s116
      %s118 = sphi 0, %s116
      %s119 = sphi 0, %s118
      %s133 = sphi 0, %s119
      %s137 = sphi 0, %s137
      %s139 = sphi 0, %s137
      %s140 = sphi 0, %s139
      %s154 = sphi 0, %s140
      %s158 = sphi 0, %s158
      %s160 = sphi 0, %s158
      %s161 = sphi 0, %s160
      %s175 = sphi 0, %s161
      %s179 = sphi 0, %s179
      %s181 = sphi 0, %s179
      %s182 = sphi 0, %s181
      %s196 = sphi 0, %s182
      %s202 = sphi 0, %s204
      %s205 = sphi 0, %s202
      %s206 = sphi 0, %s205
      %s222 = sphi 0, %s206
    $region4: #{tpu_custom_call.1} parent=1 // loop_header_branch
      %24 = sbr.rel (%p22) target = $region8
    $region5: #{tpu_custom_call.1} parent=1 // loop_body
      %s26 = ssub.s32 %s21, 1
      %s27 = ssub.s32 %s21, 2
      %s34 = sadd.s32 1, %s29
      %p35 = scmp.ge.s32.totalorder %s34, 1
      %s36 = scalar_select %p35, 0, %s34
      %s37 = sadd.s32 1, %s28
      %s38 = scalar_select %p35, %s37, %s28
      %p39 = scmp.ge.s32.totalorder %s38, 2
      %s40 = scalar_select %p39, 0, %s38
      %s41 = ssub.s32 %s28, %s40
      %s42 = ssub.s32 %s29, %s36
      %s43 = sor.u32 %s41, %s42
      %p44 = scmp.eq.s32.totalorder %s43, 0
      %s46 = sadd.s32 %s45, 1
      %s47 = scalar_select %p44, %s45, %s46
      %p50 = pneg %p44
      %p51 = scmp.eq.s32.totalorder %s21, 1
      %p52 = por %p50, %p51
      %p53 = scmp.ne.s32.totalorder %s45, %s48
      %p54 = scmp.eq.s32.totalorder %s21, 0
      %p55 = por %p53, %p54
      %p56 = scmp.ne.s32.totalorder %s45, %s48
      %p57 = scmp.eq.s32.totalorder %s26, 1
      %p58 = por %p56, %p57
      %p59 = scmp.ne.s32.totalorder %s48, %s49
      %p60 = scmp.eq.s32.totalorder %s26, 0
      %p61 = por %p59, %p60
      %p62 = scmp.ne.s32.totalorder %s48, %s49
      %p63 = scmp.eq.s32.totalorder %s27, 1
      %p64 = por %p62, %p63
      %p66 = scmp.ne.s32.totalorder %s49, %s65
      %p67 = scmp.eq.s32.totalorder %s27, 0
      %p68 = por %p66, %p67
      %s69 = ssub.s32 %s29, %s36
      %p70 = scmp.eq.s32.totalorder %s69, 0
      %s72 = sadd.s32 %s71, 1
      %s73 = scalar_select %p70, %s71, %s72
      %p76 = pneg %p70
      %p77 = scmp.eq.s32.totalorder %s21, 1
      %p78 = por %p76, %p77
      %p79 = scmp.ne.s32.totalorder %s71, %s74
      %p80 = scmp.eq.s32.totalorder %s21, 0
      %p81 = por %p79, %p80
      %p82 = scmp.ne.s32.totalorder %s71, %s74
      %p83 = scmp.eq.s32.totalorder %s26, 1
      %p84 = por %p82, %p83
      %p85 = scmp.ne.s32.totalorder %s74, %s75
      %p86 = scmp.eq.s32.totalorder %s26, 0
      %p87 = por %p85, %p86
      %p88 = scmp.ne.s32.totalorder %s74, %s75
      %p89 = scmp.eq.s32.totalorder %s27, 1
      %p90 = por %p88, %p89
      %p92 = scmp.ne.s32.totalorder %s75, %s91
      %p93 = scmp.eq.s32.totalorder %s27, 0
      %p94 = por %p92, %p93
      %s96 = sadd.s32 %s95, 1
      %p99 = scmp.eq.s32.totalorder %s21, 1
      %p100 = scmp.ne.s32.totalorder %s95, %s97
      %p101 = scmp.eq.s32.totalorder %s21, 0
      %p102 = por %p100, %p101
      %p103 = scmp.ne.s32.totalorder %s95, %s97
      %p104 = scmp.eq.s32.totalorder %s26, 1
      %p105 = por %p103, %p104
      %p106 = scmp.ne.s32.totalorder %s97, %s98
      %p107 = scmp.eq.s32.totalorder %s26, 0
      %p108 = por %p106, %p107
      %p109 = scmp.ne.s32.totalorder %s97, %s98
      %p110 = scmp.eq.s32.totalorder %s27, 1
      %p111 = por %p109, %p110
      %p113 = scmp.ne.s32.totalorder %s98, %s112
      %p114 = scmp.eq.s32.totalorder %s27, 0
      %p115 = por %p113, %p114
      %s117 = sadd.s32 %s116, 1
      %p120 = scmp.eq.s32.totalorder %s21, 1
      %p121 = scmp.ne.s32.totalorder %s116, %s118
      %p122 = scmp.eq.s32.totalorder %s21, 0
      %p123 = por %p121, %p122
      %p124 = scmp.ne.s32.totalorder %s116, %s118
      %p125 = scmp.eq.s32.totalorder %s26, 1
      %p126 = por %p124, %p125
      %p127 = scmp.ne.s32.totalorder %s118, %s119
      %p128 = scmp.eq.s32.totalorder %s26, 0
      %p129 = por %p127, %p128
      %p130 = scmp.ne.s32.totalorder %s118, %s119
      %p131 = scmp.eq.s32.totalorder %s27, 1
      %p132 = por %p130, %p131
      %p134 = scmp.ne.s32.totalorder %s119, %s133
      %p135 = scmp.eq.s32.totalorder %s27, 0
      %p136 = por %p134, %p135
      %s138 = sadd.s32 %s137, 1
      %p141 = scmp.eq.s32.totalorder %s21, 1
      %p142 = scmp.ne.s32.totalorder %s137, %s139
      %p143 = scmp.eq.s32.totalorder %s21, 0
      %p144 = por %p142, %p143
      %p145 = scmp.ne.s32.totalorder %s137, %s139
      %p146 = scmp.eq.s32.totalorder %s26, 1
      %p147 = por %p145, %p146
      %p148 = scmp.ne.s32.totalorder %s139, %s140
      %p149 = scmp.eq.s32.totalorder %s26, 0
      %p150 = por %p148, %p149
      %p151 = scmp.ne.s32.totalorder %s139, %s140
      %p152 = scmp.eq.s32.totalorder %s27, 1
      %p153 = por %p151, %p152
      %p155 = scmp.ne.s32.totalorder %s140, %s154
      %p156 = scmp.eq.s32.totalorder %s27, 0
      %p157 = por %p155, %p156
      %s159 = sadd.s32 %s158, 1
      %p162 = scmp.eq.s32.totalorder %s21, 1
      %p163 = scmp.ne.s32.totalorder %s158, %s160
      %p164 = scmp.eq.s32.totalorder %s21, 0
      %p165 = por %p163, %p164
      %p166 = scmp.ne.s32.totalorder %s158, %s160
      %p167 = scmp.eq.s32.totalorder %s26, 1
      %p168 = por %p166, %p167
      %p169 = scmp.ne.s32.totalorder %s160, %s161
      %p170 = scmp.eq.s32.totalorder %s26, 0
      %p171 = por %p169, %p170
      %p172 = scmp.ne.s32.totalorder %s160, %s161
      %p173 = scmp.eq.s32.totalorder %s27, 1
      %p174 = por %p172, %p173
      %p176 = scmp.ne.s32.totalorder %s161, %s175
      %p177 = scmp.eq.s32.totalorder %s27, 0
      %p178 = por %p176, %p177
      %s180 = sadd.s32 %s179, 1
      %p183 = scmp.eq.s32.totalorder %s21, 1
      %p184 = scmp.ne.s32.totalorder %s179, %s181
      %p185 = scmp.eq.s32.totalorder %s21, 0
      %p186 = por %p184, %p185
      %p187 = scmp.ne.s32.totalorder %s179, %s181
      %p188 = scmp.eq.s32.totalorder %s26, 1
      %p189 = por %p187, %p188
      %p190 = scmp.ne.s32.totalorder %s181, %s182
      %p191 = scmp.eq.s32.totalorder %s26, 0
      %p192 = por %p190, %p191
      %p193 = scmp.ne.s32.totalorder %s181, %s182
      %p194 = scmp.eq.s32.totalorder %s27, 1
      %p195 = por %p193, %p194
      %p197 = scmp.ne.s32.totalorder %s182, %s196
      %p198 = scmp.eq.s32.totalorder %s27, 0
      %p199 = por %p197, %p198
      %s200 = ssub.s32 %s28, %s40
      %p201 = scmp.eq.s32.totalorder %s200, 0
      %s203 = sadd.s32 %s202, 1
      %s204 = scalar_select %p201, %s202, %s203
      %p207 = pneg %p201
      %p208 = scmp.eq.s32.totalorder %s21, 1
      %p209 = por %p207, %p208
      %p210 = scmp.ne.s32.totalorder %s202, %s205
      %p211 = scmp.eq.s32.totalorder %s21, 0
      %p212 = por %p210, %p211
      %p213 = scmp.ne.s32.totalorder %s202, %s205
      %p214 = scmp.eq.s32.totalorder %s26, 1
      %p215 = por %p213, %p214
      %p216 = scmp.ne.s32.totalorder %s205, %s206
      %p217 = scmp.eq.s32.totalorder %s26, 0
      %p218 = por %p216, %p217
      %p219 = scmp.ne.s32.totalorder %s205, %s206
      %p220 = scmp.eq.s32.totalorder %s27, 1
      %p221 = por %p219, %p220
      %p223 = scmp.ne.s32.totalorder %s206, %s222
      %p224 = scmp.eq.s32.totalorder %s27, 0
      %p225 = por %p223, %p224
      %p226 = scmp.le.s32.totalorder 1, %s21
      %p227 = scmp.lt.s32.totalorder %s21, 3
      %p228 = pnand %p226, %p227
      %p229 = pneg %p228
      // Predicated region
      $region9: #{tpu_custom_call.1} parent=5 // pred_check
        _
      $region10: #{tpu_custom_call.1} parent=5 // pred_check_branch
        %231 = sbr.rel (%p228) target = $region12
      $region11: #{tpu_custom_call.1} parent=5 // pred_region
        %s232 = ssub.s32 %s21, 1
        // Predicated region
        $region13: #{tpu_custom_call.1} parent=11 // pred_check
          %p233 = pneg %p87
        $region14: #{tpu_custom_call.1} parent=11 // pred_check_branch
          %235 = sbr.rel (%p233) target = $region16
        $region15: #{tpu_custom_call.1} parent=11 // pred_region
          %s236 = smul.u32 48, %s31
          %s238 = ssub.s32 3072, 3072
          %239 = vsyncadd [#allocation7], %s238
          %s240 = smul.addr %s236, 64
          %s241 = scalar_lea.hbm %s1, %s240
          %s242 = sshll.u32 [#allocation6], 4
          %s243 = int_to_ptr.vmem [resolvable:$true] %s242
          %248 = dma.hbm_to_vmem [thread:$0]  %s241, 3072, %s243, [#allocation7], 64, 64, 4
        $region16: #{tpu_custom_call.1} parent=11 // pred_fallthru
          _
        // Predicated region
        $region17: #{tpu_custom_call.1} parent=11 // pred_check
          %p249 = pneg %p108
        $region18: #{tpu_custom_call.1} parent=11 // pred_check_branch
          %251 = sbr.rel (%p249) target = $region20
        $region19: #{tpu_custom_call.1} parent=11 // pred_region
          _
        $region20: #{tpu_custom_call.1} parent=11 // pred_fallthru
          _
        // Predicated region
        $region21: #{tpu_custom_call.1} parent=11 // pred_check
          %p252 = pneg %p129
        $region22: #{tpu_custom_call.1} parent=11 // pred_check_branch
          %254 = sbr.rel (%p252) target = $region24
        $region23: #{tpu_custom_call.1} parent=11 // pred_region
          %s256 = ssub.s32 1024, 1024
          %257 = vsyncadd [#allocation7], %s256
          %s258 = sshll.u32 [#allocation8], 4
          %s259 = int_to_ptr.vmem [resolvable:$true] %s258
          %264 = dma.hbm_to_vmem [thread:$0]  %s3, 1024, %s259, [#allocation7], 64, 64, 4
        $region24: #{tpu_custom_call.1} parent=11 // pred_fallthru
          _
        // Predicated region
        $region25: #{tpu_custom_call.1} parent=11 // pred_check
          %p265 = pneg %p150
        $region26: #{tpu_custom_call.1} parent=11 // pred_check_branch
          %267 = sbr.rel (%p265) target = $region28
        $region27: #{tpu_custom_call.1} parent=11 // pred_region
          _
        $region28: #{tpu_custom_call.1} parent=11 // pred_fallthru
          _
        // Predicated region
        $region29: #{tpu_custom_call.1} parent=11 // pred_check
          %p268 = pneg %p171
        $region30: #{tpu_custom_call.1} parent=11 // pred_check_branch
          %270 = sbr.rel (%p268) target = $region32
        $region31: #{tpu_custom_call.1} parent=11 // pred_region
          %s272 = ssub.s32 1024, 1024
          %273 = vsyncadd [#allocation10], %s272
          %s274 = sshll.u32 [#allocation9], 4
          %s275 = int_to_ptr.vmem [resolvable:$true] %s274
          %280 = dma.hbm_to_vmem [thread:$0]  %s5, 1024, %s275, [#allocation10], 64, 64, 4
        $region32: #{tpu_custom_call.1} parent=11 // pred_fallthru
          _
        // Predicated region
        $region33: #{tpu_custom_call.1} parent=11 // pred_check
          %p281 = pneg %p192
        $region34: #{tpu_custom_call.1} parent=11 // pred_check_branch
          %283 = sbr.rel (%p281) target = $region36
        $region35: #{tpu_custom_call.1} parent=11 // pred_region
          _
        $region36: #{tpu_custom_call.1} parent=11 // pred_fallthru
          _
      $region12: #{tpu_custom_call.1} parent=5 // pred_fallthru
        _
      %p284 = scmp.lt.s32.totalorder %s21, 2
      // Predicated region
      $region37: #{tpu_custom_call.1} parent=5 // pred_check
        %p285 = pneg %p284
      $region38: #{tpu_custom_call.1} parent=5 // pred_check_branch
        %287 = sbr.rel (%p285) target = $region40
      $region39: #{tpu_custom_call.1} parent=5 // pred_region
        // Predicated region
        $region41: #{tpu_custom_call.1} parent=39 // pred_check
          %p288 = pneg %p55
        $region42: #{tpu_custom_call.1} parent=39 // pred_check_branch
          %290 = sbr.rel (%p288) target = $region44
        $region43: #{tpu_custom_call.1} parent=39 // pred_region
          %s291 = sand.u32 %s45, 1
          %s292 = scalar_lea.sflag [#allocation4], %s291
          %s293 = sand.u32 %s45, 1
          %s294 = smul.addr %s293, 384
          %s295 = scalar_lea.vmem [#allocation3], %s294
          %s296 = smul.u32 32, %s28
          %s297 = smul.u32 3, %s29
          %s299 = ssub.s32 6144, 6144
          %300 = vsyncadd %s292, %s299
          %s301 = smul.addr %s296, 3
          %s302 = sadd.s32 %s297, %s301
          %s303 = smul.addr %s302, 64
          %s304 = scalar_lea.hbm %s0, %s303
          %s305 = sshll.u32 %s295, 4
          %s306 = int_to_ptr.vmem [resolvable:$true] %s305
          %311 = dma.hbm_to_vmem [thread:$0]  %s304, 6144, %s306, %s292, 192, 192, 12
        $region44: #{tpu_custom_call.1} parent=39 // pred_fallthru
          _
      $region40: #{tpu_custom_call.1} parent=5 // pred_fallthru
        _
      %p312 = scmp.le.s32.totalorder 1, %s21
      %p313 = scmp.lt.s32.totalorder %s21, 3
      %p314 = pnand %p312, %p313
      %p315 = pneg %p314
      // Predicated region
      $region45: #{tpu_custom_call.1} parent=5 // pred_check
        _
      $region46: #{tpu_custom_call.1} parent=5 // pred_check_branch
        %317 = sbr.rel (%p314) target = $region48
      $region47: #{tpu_custom_call.1} parent=5 // pred_region
        %s318 = ssub.s32 %s21, 1
        %s319 = sand.u32 %s48, 1
        %s320 = scalar_lea.sflag [#allocation4], %s319
        %s321 = sand.u32 %s48, 1
        %s322 = smul.addr %s321, 384
        %s323 = scalar_lea.vmem [#allocation3], %s322
        // Predicated region
        $region49: #{tpu_custom_call.1} parent=47 // pred_check
          %p324 = pneg %p61
        $region50: #{tpu_custom_call.1} parent=47 // pred_check_branch
          %326 = sbr.rel (%p324) target = $region52
        $region51: #{tpu_custom_call.1} parent=47 // pred_region
          %327 = dma.done %s320, 6144
        $region52: #{tpu_custom_call.1} parent=47 // pred_fallthru
          _
        // Predicated region
        $region53: #{tpu_custom_call.1} parent=47 // pred_check
          %p328 = pneg %p87
        $region54: #{tpu_custom_call.1} parent=47 // pred_check_branch
          %330 = sbr.rel (%p328) target = $region56
        $region55: #{tpu_custom_call.1} parent=47 // pred_region
          %331 = dma.done [#allocation7], 3072
        $region56: #{tpu_custom_call.1} parent=47 // pred_fallthru
          _
        // Predicated region
        $region57: #{tpu_custom_call.1} parent=47 // pred_check
          %p332 = pneg %p129
        $region58: #{tpu_custom_call.1} parent=47 // pred_check_branch
          %334 = sbr.rel (%p332) target = $region60
        $region59: #{tpu_custom_call.1} parent=47 // pred_region
          %335 = dma.done [#allocation7], 1024
        $region60: #{tpu_custom_call.1} parent=47 // pred_fallthru
          _
        // Predicated region
        $region61: #{tpu_custom_call.1} parent=47 // pred_check
          %p336 = pneg %p171
        $region62: #{tpu_custom_call.1} parent=47 // pred_check_branch
          %338 = sbr.rel (%p336) target = $region64
        $region63: #{tpu_custom_call.1} parent=47 // pred_region
          %339 = dma.done [#allocation10], 1024
        $region64: #{tpu_custom_call.1} parent=47 // pred_fallthru
          _
        %s340 = sand.u32 %s48, 1
        %s341 = scalar_lea.sflag [#allocation4], %s340
        %s342 = sand.u32 %s48, 1
        %s343 = smul.addr %s342, 384
        %s344 = scalar_lea.vmem [#allocation3], %s343
        %p345 = pneg %p61
        %p346 = pneg %p58
        %p347 = pneg %p87
        %p348 = pneg %p84
        %p349 = pneg %p108
        %p350 = pneg %p105
        %p351 = pneg %p129
        %p352 = pneg %p126
        %p353 = pneg %p150
        %p354 = pneg %p147
        %p355 = pneg %p171
        %p356 = pneg %p168
        %p357 = pneg %p192
        %p358 = pneg %p189
        %p359 = pneg %p218
        %p360 = pneg %p215
        %s361 = sand.u32 %s205, 1
        %s362 = scalar_lea.sflag [#allocation5], %s361
        %s363 = sand.u32 %s205, 1
        %s364 = smul.addr %s363, 128
        %s365 = scalar_lea.vmem [#allocation11], %s364
        %s366 = smul.u32 32, %s30
        %s367 = smul.u32 3, %s31
        %s368 = smul.u32 48, %s31
        %s369 = smul.u32 32, %s30
        %p371 = scmp.eq.s32.totalorder %s31, 0
        // Predicated region
        $region65: #{tpu_custom_call.1} parent=47 // pred_check
          %p372 = pneg %p371
        $region66: #{tpu_custom_call.1} parent=47 // pred_check_branch
          %374 = sbr.rel (%p372) target = $region68
        $region67: #{tpu_custom_call.1} parent=47 // pred_region
          %375 = vst [vmem:[#allocation2] sm:$0xff] 0.0
          %376 = vst [vmem:[#allocation2 + $0x8] sm:$0xff] 0.0
          %377 = vst [vmem:[#allocation2 + $0x10] sm:$0xff] 0.0
          %378 = vst [vmem:[#allocation2 + $0x18] sm:$0xff] 0.0
          %379 = vst [vmem:[#allocation2 + $0x20] sm:$0xff] 0.0
          %380 = vst [vmem:[#allocation2 + $0x28] sm:$0xff] 0.0
          %381 = vst [vmem:[#allocation2 + $0x30] sm:$0xff] 0.0
          %382 = vst [vmem:[#allocation2 + $0x38] sm:$0xff] 0.0
          %383 = vst [vmem:[#allocation2 + $0x40] sm:$0xff] 0.0
          %384 = vst [vmem:[#allocation2 + $0x48] sm:$0xff] 0.0
          %385 = vst [vmem:[#allocation2 + $0x50] sm:$0xff] 0.0
          %386 = vst [vmem:[#allocation2 + $0x58] sm:$0xff] 0.0
          %387 = vst [vmem:[#allocation2 + $0x60] sm:$0xff] 0.0
          %388 = vst [vmem:[#allocation2 + $0x68] sm:$0xff] 0.0
          %389 = vst [vmem:[#allocation2 + $0x70] sm:$0xff] 0.0
          %390 = vst [vmem:[#allocation2 + $0x78] sm:$0xff] 0.0
          %391 = vst [vmem:[#allocation2 + $0x80] sm:$0xff] 0.0
          %392 = vst [vmem:[#allocation2 + $0x88] sm:$0xff] 0.0
          %393 = vst [vmem:[#allocation2 + $0x90] sm:$0xff] 0.0
          %394 = vst [vmem:[#allocation2 + $0x98] sm:$0xff] 0.0
          %395 = vst [vmem:[#allocation2 + $0xa0] sm:$0xff] 0.0
          %396 = vst [vmem:[#allocation2 + $0xa8] sm:$0xff] 0.0
          %397 = vst [vmem:[#allocation2 + $0xb0] sm:$0xff] 0.0
          %398 = vst [vmem:[#allocation2 + $0xb8] sm:$0xff] 0.0
          %399 = vst [vmem:[#allocation2 + $0xc0] sm:$0xff] 0.0
          %400 = vst [vmem:[#allocation2 + $0xc8] sm:$0xff] 0.0
          %401 = vst [vmem:[#allocation2 + $0xd0] sm:$0xff] 0.0
          %402 = vst [vmem:[#allocation2 + $0xd8] sm:$0xff] 0.0
          %403 = vst [vmem:[#allocation2 + $0xe0] sm:$0xff] 0.0
          %404 = vst [vmem:[#allocation2 + $0xe8] sm:$0xff] 0.0
          %405 = vst [vmem:[#allocation2 + $0xf0] sm:$0xff] 0.0
          %406 = vst [vmem:[#allocation2 + $0xf8] sm:$0xff] 0.0
        $region68: #{tpu_custom_call.1} parent=47 // pred_fallthru
          _
        %v407 = vld [vmem:[#allocation2] sm:$0xff]
        %v408 = vld [vmem:[#allocation2 + $0x8] sm:$0xff]
        %v409 = vld [vmem:[#allocation2 + $0x10] sm:$0xff]
        %v410 = vld [vmem:[#allocation2 + $0x18] sm:$0xff]
        %v411 = vld [vmem:[#allocation2 + $0x20] sm:$0xff]
        %v412 = vld [vmem:[#allocation2 + $0x28] sm:$0xff]
        %v413 = vld [vmem:[#allocation2 + $0x30] sm:$0xff]
        %v414 = vld [vmem:[#allocation2 + $0x38] sm:$0xff]
        %v415 = vld [vmem:[#allocation2 + $0x40] sm:$0xff]
        %v416 = vld [vmem:[#allocation2 + $0x48] sm:$0xff]
        %v417 = vld [vmem:[#allocation2 + $0x50] sm:$0xff]
        %v418 = vld [vmem:[#allocation2 + $0x58] sm:$0xff]
        %v419 = vld [vmem:[#allocation2 + $0x60] sm:$0xff]
        %v420 = vld [vmem:[#allocation2 + $0x68] sm:$0xff]
        %v421 = vld [vmem:[#allocation2 + $0x70] sm:$0xff]
        %v422 = vld [vmem:[#allocation2 + $0x78] sm:$0xff]
        %v423 = vld [vmem:[#allocation2 + $0x80] sm:$0xff]
        %v424 = vld [vmem:[#allocation2 + $0x88] sm:$0xff]
        %v425 = vld [vmem:[#allocation2 + $0x90] sm:$0xff]
        %v426 = vld [vmem:[#allocation2 + $0x98] sm:$0xff]
        %v427 = vld [vmem:[#allocation2 + $0xa0] sm:$0xff]
        %v428 = vld [vmem:[#allocation2 + $0xa8] sm:$0xff]
        %v429 = vld [vmem:[#allocation2 + $0xb0] sm:$0xff]
        %v430 = vld [vmem:[#allocation2 + $0xb8] sm:$0xff]
        %v431 = vld [vmem:[#allocation2 + $0xc0] sm:$0xff]
        %v432 = vld [vmem:[#allocation2 + $0xc8] sm:$0xff]
        %v433 = vld [vmem:[#allocation2 + $0xd0] sm:$0xff]
        %v434 = vld [vmem:[#allocation2 + $0xd8] sm:$0xff]
        %v435 = vld [vmem:[#allocation2 + $0xe0] sm:$0xff]
        %v436 = vld [vmem:[#allocation2 + $0xe8] sm:$0xff]
        %v437 = vld [vmem:[#allocation2 + $0xf0] sm:$0xff]
        %v438 = vld [vmem:[#allocation2 + $0xf8] sm:$0xff]
        %v439 = vld [vmem:[%s323] sm:$0xff]
        %v440 = vld [vmem:[%s323 + $0x8] sm:$0xf]
        %v441 = vld [vmem:[%s323 + $0xc] sm:$0xff]
        %v442 = vld [vmem:[%s323 + $0x14] sm:$0xf]
        %v443 = vld [vmem:[%s323 + $0x18] sm:$0xff]
        %v444 = vld [vmem:[%s323 + $0x20] sm:$0xf]
        %v445 = vld [vmem:[%s323 + $0x24] sm:$0xff]
        %v446 = vld [vmem:[%s323 + $0x2c] sm:$0xf]
        %v447 = vld [vmem:[%s323 + $0x30] sm:$0xff]
        %v448 = vld [vmem:[%s323 + $0x38] sm:$0xf]
        %v449 = vld [vmem:[%s323 + $0x3c] sm:$0xff]
        %v450 = vld [vmem:[%s323 + $0x44] sm:$0xf]
        %v451 = vld [vmem:[%s323 + $0x48] sm:$0xff]
        %v452 = vld [vmem:[%s323 + $0x50] sm:$0xf]
        %v453 = vld [vmem:[%s323 + $0x54] sm:$0xff]
        %v454 = vld [vmem:[%s323 + $0x5c] sm:$0xf]
        %v455 = vld [vmem:[%s323 + $0x60] sm:$0xff]
        %v456 = vld [vmem:[%s323 + $0x68] sm:$0xf]
        %v457 = vld [vmem:[%s323 + $0x6c] sm:$0xff]
        %v458 = vld [vmem:[%s323 + $0x74] sm:$0xf]
        %v459 = vld [vmem:[%s323 + $0x78] sm:$0xff]
        %v460 = vld [vmem:[%s323 + $0x80] sm:$0xf]
        %v461 = vld [vmem:[%s323 + $0x84] sm:$0xff]
        %v462 = vld [vmem:[%s323 + $0x8c] sm:$0xf]
        %v463 = vld [vmem:[%s323 + $0x90] sm:$0xff]
        %v464 = vld [vmem:[%s323 + $0x98] sm:$0xf]
        %v465 = vld [vmem:[%s323 + $0x9c] sm:$0xff]
        %v466 = vld [vmem:[%s323 + $0xa4] sm:$0xf]
        %v467 = vld [vmem:[%s323 + $0xa8] sm:$0xff]
        %v468 = vld [vmem:[%s323 + $0xb0] sm:$0xf]
        %v469 = vld [vmem:[%s323 + $0xb4] sm:$0xff]
        %v470 = vld [vmem:[%s323 + $0xbc] sm:$0xf]
        %v471 = vld [vmem:[%s323 + $0xc0] sm:$0xff]
        %v472 = vld [vmem:[%s323 + $0xc8] sm:$0xf]
        %v473 = vld [vmem:[%s323 + $0xcc] sm:$0xff]
        %v474 = vld [vmem:[%s323 + $0xd4] sm:$0xf]
        %v475 = vld [vmem:[%s323 + $0xd8] sm:$0xff]
        %v476 = vld [vmem:[%s323 + $0xe0] sm:$0xf]
        %v477 = vld [vmem:[%s323 + $0xe4] sm:$0xff]
        %v478 = vld [vmem:[%s323 + $0xec] sm:$0xf]
        %v479 = vld [vmem:[%s323 + $0xf0] sm:$0xff]
        %v480 = vld [vmem:[%s323 + $0xf8] sm:$0xf]
        %v481 = vld [vmem:[%s323 + $0xfc] sm:$0xff]
        %v482 = vld [vmem:[%s323 + $0x104] sm:$0xf]
        %v483 = vld [vmem:[%s323 + $0x108] sm:$0xff]
        %v484 = vld [vmem:[%s323 + $0x110] sm:$0xf]
        %v485 = vld [vmem:[%s323 + $0x114] sm:$0xff]
        %v486 = vld [vmem:[%s323 + $0x11c] sm:$0xf]
        %v487 = vld [vmem:[%s323 + $0x120] sm:$0xff]
        %v488 = vld [vmem:[%s323 + $0x128] sm:$0xf]
        %v489 = vld [vmem:[%s323 + $0x12c] sm:$0xff]
        %v490 = vld [vmem:[%s323 + $0x134] sm:$0xf]
        %v491 = vld [vmem:[%s323 + $0x138] sm:$0xff]
        %v492 = vld [vmem:[%s323 + $0x140] sm:$0xf]
        %v493 = vld [vmem:[%s323 + $0x144] sm:$0xff]
        %v494 = vld [vmem:[%s323 + $0x14c] sm:$0xf]
        %v495 = vld [vmem:[%s323 + $0x150] sm:$0xff]
        %v496 = vld [vmem:[%s323 + $0x158] sm:$0xf]
        %v497 = vld [vmem:[%s323 + $0x15c] sm:$0xff]
        %v498 = vld [vmem:[%s323 + $0x164] sm:$0xf]
        %v499 = vld [vmem:[%s323 + $0x168] sm:$0xff]
        %v500 = vld [vmem:[%s323 + $0x170] sm:$0xf]
        %v501 = vld [vmem:[%s323 + $0x174] sm:$0xff]
        %v502 = vld [vmem:[%s323 + $0x17c] sm:$0xf]
        %v503 = vld [vmem:[#allocation6] sm:$0xf]
        %v504 = vld [vmem:[#allocation6 + $0x4] sm:$0xf]
        %v505 = vld [vmem:[#allocation6 + $0x8] sm:$0xf]
        %v506 = vld [vmem:[#allocation6 + $0xc] sm:$0xf]
        %v507 = vld [vmem:[#allocation6 + $0x10] sm:$0xf]
        %v508 = vld [vmem:[#allocation6 + $0x14] sm:$0xf]
        %v509 = vld [vmem:[#allocation6 + $0x18] sm:$0xf]
        %v510 = vld [vmem:[#allocation6 + $0x1c] sm:$0xf]
        %v511 = vld [vmem:[#allocation6 + $0x20] sm:$0xf]
        %v512 = vld [vmem:[#allocation6 + $0x24] sm:$0xf]
        %v513 = vld [vmem:[#allocation6 + $0x28] sm:$0xf]
        %v514 = vld [vmem:[#allocation6 + $0x2c] sm:$0xf]
        %v515 = vld [vmem:[#allocation6 + $0x30] sm:$0xf]
        %v516 = vld [vmem:[#allocation6 + $0x34] sm:$0xf]
        %v517 = vld [vmem:[#allocation6 + $0x38] sm:$0xf]
        %v518 = vld [vmem:[#allocation6 + $0x3c] sm:$0xf]
        %v519 = vld [vmem:[#allocation6 + $0x40] sm:$0xf]
        %v520 = vld [vmem:[#allocation6 + $0x44] sm:$0xf]
        %v521 = vld [vmem:[#allocation6 + $0x48] sm:$0xf]
        %v522 = vld [vmem:[#allocation6 + $0x4c] sm:$0xf]
        %v523 = vld [vmem:[#allocation6 + $0x50] sm:$0xf]
        %v524 = vld [vmem:[#allocation6 + $0x54] sm:$0xf]
        %v525 = vld [vmem:[#allocation6 + $0x58] sm:$0xf]
        %v526 = vld [vmem:[#allocation6 + $0x5c] sm:$0xf]
        %v527 = vld [vmem:[#allocation6 + $0x60] sm:$0xf]
        %v528 = vld [vmem:[#allocation6 + $0x64] sm:$0xf]
        %v529 = vld [vmem:[#allocation6 + $0x68] sm:$0xf]
        %v530 = vld [vmem:[#allocation6 + $0x6c] sm:$0xf]
        %v531 = vld [vmem:[#allocation6 + $0x70] sm:$0xf]
        %v532 = vld [vmem:[#allocation6 + $0x74] sm:$0xf]
        %v533 = vld [vmem:[#allocation6 + $0x78] sm:$0xf]
        %v534 = vld [vmem:[#allocation6 + $0x7c] sm:$0xf]
        %v535 = vld [vmem:[#allocation6 + $0x80] sm:$0xf]
        %v536 = vld [vmem:[#allocation6 + $0x84] sm:$0xf]
        %v537 = vld [vmem:[#allocation6 + $0x88] sm:$0xf]
        %v538 = vld [vmem:[#allocation6 + $0x8c] sm:$0xf]
        %v539 = vld [vmem:[#allocation6 + $0x90] sm:$0xf]
        %v540 = vld [vmem:[#allocation6 + $0x94] sm:$0xf]
        %v541 = vld [vmem:[#allocation6 + $0x98] sm:$0xf]
        %v542 = vld [vmem:[#allocation6 + $0x9c] sm:$0xf]
        %v543 = vld [vmem:[#allocation6 + $0xa0] sm:$0xf]
        %v544 = vld [vmem:[#allocation6 + $0xa4] sm:$0xf]
        %v545 = vld [vmem:[#allocation6 + $0xa8] sm:$0xf]
        %v546 = vld [vmem:[#allocation6 + $0xac] sm:$0xf]
        %v547 = vld [vmem:[#allocation6 + $0xb0] sm:$0xf]
        %v548 = vld [vmem:[#allocation6 + $0xb4] sm:$0xf]
        %v549 = vld [vmem:[#allocation6 + $0xb8] sm:$0xf]
        %v550 = vld [vmem:[#allocation6 + $0xbc] sm:$0xf]
        %v615 = vunpack.c.l.b16 %v439
        %v616 = vunpack.c.h.b16 %v439
        %v617 = vunpack.c.l.b16 %v440
        %v618 = vunpack.c.l.b16 %v441
        %v619 = vunpack.c.h.b16 %v441
        %v620 = vunpack.c.l.b16 %v442
        %v621 = vunpack.c.l.b16 %v443
        %v622 = vunpack.c.h.b16 %v443
        %v623 = vunpack.c.l.b16 %v444
        %v624 = vunpack.c.l.b16 %v445
        %v625 = vunpack.c.h.b16 %v445
        %v626 = vunpack.c.l.b16 %v446
        %v627 = vunpack.c.l.b16 %v447
        %v628 = vunpack.c.h.b16 %v447
        %v629 = vunpack.c.l.b16 %v448
        %v630 = vunpack.c.l.b16 %v449
        %v631 = vunpack.c.h.b16 %v449
        %v632 = vunpack.c.l.b16 %v450
        %v633 = vunpack.c.l.b16 %v451
        %v634 = vunpack.c.h.b16 %v451
        %v635 = vunpack.c.l.b16 %v452
        %v636 = vunpack.c.l.b16 %v453
        %v637 = vunpack.c.h.b16 %v453
        %v638 = vunpack.c.l.b16 %v454
        %v639 = vunpack.c.l.b16 %v455
        %v640 = vunpack.c.h.b16 %v455
        %v641 = vunpack.c.l.b16 %v456
        %v642 = vunpack.c.l.b16 %v457
        %v643 = vunpack.c.h.b16 %v457
        %v644 = vunpack.c.l.b16 %v458
        %v645 = vunpack.c.l.b16 %v459
        %v646 = vunpack.c.h.b16 %v459
        %v647 = vunpack.c.l.b16 %v460
        %v648 = vunpack.c.l.b16 %v461
        %v649 = vunpack.c.h.b16 %v461
        %v650 = vunpack.c.l.b16 %v462
        %v651 = vunpack.c.l.b16 %v463
        %v652 = vunpack.c.h.b16 %v463
        %v653 = vunpack.c.l.b16 %v464
        %v654 = vunpack.c.l.b16 %v465
        %v655 = vunpack.c.h.b16 %v465
        %v656 = vunpack.c.l.b16 %v466
        %v657 = vunpack.c.l.b16 %v467
        %v658 = vunpack.c.h.b16 %v467
        %v659 = vunpack.c.l.b16 %v468
        %v660 = vunpack.c.l.b16 %v469
        %v661 = vunpack.c.h.b16 %v469
        %v662 = vunpack.c.l.b16 %v470
        %v663 = vunpack.c.l.b16 %v471
        %v664 = vunpack.c.h.b16 %v471
        %v665 = vunpack.c.l.b16 %v472
        %v666 = vunpack.c.l.b16 %v473
        %v667 = vunpack.c.h.b16 %v473
        %v668 = vunpack.c.l.b16 %v474
        %v669 = vunpack.c.l.b16 %v475
        %v670 = vunpack.c.h.b16 %v475
        %v671 = vunpack.c.l.b16 %v476
        %v672 = vunpack.c.l.b16 %v477
        %v673 = vunpack.c.h.b16 %v477
        %v674 = vunpack.c.l.b16 %v478
        %v675 = vunpack.c.l.b16 %v479
        %v676 = vunpack.c.h.b16 %v479
        %v677 = vunpack.c.l.b16 %v480
        %v678 = vunpack.c.l.b16 %v481
        %v679 = vunpack.c.h.b16 %v481
        %v680 = vunpack.c.l.b16 %v482
        %v681 = vunpack.c.l.b16 %v483
        %v682 = vunpack.c.h.b16 %v483
        %v683 = vunpack.c.l.b16 %v484
        %v684 = vunpack.c.l.b16 %v485
        %v685 = vunpack.c.h.b16 %v485
        %v686 = vunpack.c.l.b16 %v486
        %v687 = vunpack.c.l.b16 %v487
        %v688 = vunpack.c.h.b16 %v487
        %v689 = vunpack.c.l.b16 %v488
        %v690 = vunpack.c.l.b16 %v489
        %v691 = vunpack.c.h.b16 %v489
        %v692 = vunpack.c.l.b16 %v490
        %v693 = vunpack.c.l.b16 %v491
        %v694 = vunpack.c.h.b16 %v491
        %v695 = vunpack.c.l.b16 %v492
        %v696 = vunpack.c.l.b16 %v493
        %v697 = vunpack.c.h.b16 %v493
        %v698 = vunpack.c.l.b16 %v494
        %v699 = vunpack.c.l.b16 %v495
        %v700 = vunpack.c.h.b16 %v495
        %v701 = vunpack.c.l.b16 %v496
        %v702 = vunpack.c.l.b16 %v497
        %v703 = vunpack.c.h.b16 %v497
        %v704 = vunpack.c.l.b16 %v498
        %v705 = vunpack.c.l.b16 %v499
        %v706 = vunpack.c.h.b16 %v499
        %v707 = vunpack.c.l.b16 %v500
        %v708 = vunpack.c.l.b16 %v501
        %v709 = vunpack.c.h.b16 %v501
        %v710 = vunpack.c.l.b16 %v502
        %v711 = vpack.c.b16 %v618, %v615
        %v712 = vpack.c.b16 %v619, %v616
        %v713 = vpack.c.b16 %v620, %v617
        %v714 = vpack.c.b16 %v624, %v621
        %v715 = vpack.c.b16 %v625, %v622
        %v716 = vpack.c.b16 %v626, %v623
        %v717 = vpack.c.b16 %v630, %v627
        %v718 = vpack.c.b16 %v631, %v628
        %v719 = vpack.c.b16 %v632, %v629
        %v720 = vpack.c.b16 %v636, %v633
        %v721 = vpack.c.b16 %v637, %v634
        %v722 = vpack.c.b16 %v638, %v635
        %v723 = vpack.c.b16 %v642, %v639
        %v724 = vpack.c.b16 %v643, %v640
        %v725 = vpack.c.b16 %v644, %v641
        %v726 = vpack.c.b16 %v648, %v645
        %v727 = vpack.c.b16 %v649, %v646
        %v728 = vpack.c.b16 %v650, %v647
        %v729 = vpack.c.b16 %v654, %v651
        %v730 = vpack.c.b16 %v655, %v652
        %v731 = vpack.c.b16 %v656, %v653
        %v732 = vpack.c.b16 %v660, %v657
        %v733 = vpack.c.b16 %v661, %v658
        %v734 = vpack.c.b16 %v662, %v659
        %v735 = vpack.c.b16 %v666, %v663
        %v736 = vpack.c.b16 %v667, %v664
        %v737 = vpack.c.b16 %v668, %v665
        %v738 = vpack.c.b16 %v672, %v669
        %v739 = vpack.c.b16 %v673, %v670
        %v740 = vpack.c.b16 %v674, %v671
        %v741 = vpack.c.b16 %v678, %v675
        %v742 = vpack.c.b16 %v679, %v676
        %v743 = vpack.c.b16 %v680, %v677
        %v744 = vpack.c.b16 %v684, %v681
        %v745 = vpack.c.b16 %v685, %v682
        %v746 = vpack.c.b16 %v686, %v683
        %v747 = vpack.c.b16 %v690, %v687
        %v748 = vpack.c.b16 %v691, %v688
        %v749 = vpack.c.b16 %v692, %v689
        %v750 = vpack.c.b16 %v696, %v693
        %v751 = vpack.c.b16 %v697, %v694
        %v752 = vpack.c.b16 %v698, %v695
        %v753 = vpack.c.b16 %v702, %v699
        %v754 = vpack.c.b16 %v703, %v700
        %v755 = vpack.c.b16 %v704, %v701
        %v756 = vpack.c.b16 %v708, %v705
        %v757 = vpack.c.b16 %v709, %v706
        %v758 = vpack.c.b16 %v710, %v707
        %v855 = vunpack.c.l.b16 %v503
        %v856 = vunpack.c.l.b16 %v504
        %v857 = vunpack.c.l.b16 %v505
        %v858 = vunpack.c.l.b16 %v506
        %v859 = vunpack.c.l.b16 %v507
        %v860 = vunpack.c.l.b16 %v508
        %v861 = vunpack.c.l.b16 %v509
        %v862 = vunpack.c.l.b16 %v510
        %v863 = vunpack.c.l.b16 %v511
        %v864 = vunpack.c.l.b16 %v512
        %v865 = vunpack.c.l.b16 %v513
        %v866 = vunpack.c.l.b16 %v514
        %v867 = vunpack.c.l.b16 %v515
        %v868 = vunpack.c.l.b16 %v516
        %v869 = vunpack.c.l.b16 %v517
        %v870 = vunpack.c.l.b16 %v518
        %v871 = vunpack.c.l.b16 %v519
        %v872 = vunpack.c.l.b16 %v520
        %v873 = vunpack.c.l.b16 %v521
        %v874 = vunpack.c.l.b16 %v522
        %v875 = vunpack.c.l.b16 %v523
        %v876 = vunpack.c.l.b16 %v524
        %v877 = vunpack.c.l.b16 %v525
        %v878 = vunpack.c.l.b16 %v526
        %v879 = vunpack.c.l.b16 %v527
        %v880 = vunpack.c.l.b16 %v528
        %v881 = vunpack.c.l.b16 %v529
        %v882 = vunpack.c.l.b16 %v530
        %v883 = vunpack.c.l.b16 %v531
        %v884 = vunpack.c.l.b16 %v532
        %v885 = vunpack.c.l.b16 %v533
        %v886 = vunpack.c.l.b16 %v534
        %v887 = vunpack.c.l.b16 %v535
        %v888 = vunpack.c.l.b16 %v536
        %v889 = vunpack.c.l.b16 %v537
        %v890 = vunpack.c.l.b16 %v538
        %v891 = vunpack.c.l.b16 %v539
        %v892 = vunpack.c.l.b16 %v540
        %v893 = vunpack.c.l.b16 %v541
        %v894 = vunpack.c.l.b16 %v542
        %v895 = vunpack.c.l.b16 %v543
        %v896 = vunpack.c.l.b16 %v544
        %v897 = vunpack.c.l.b16 %v545
        %v898 = vunpack.c.l.b16 %v546
        %v899 = vunpack.c.l.b16 %v547
        %v900 = vunpack.c.l.b16 %v548
        %v901 = vunpack.c.l.b16 %v549
        %v902 = vunpack.c.l.b16 %v550
        %v903 = vpack.c.b16 %v856, %v855
        %v904 = vpack.c.b16 %v858, %v857
        %v905 = vpack.c.b16 %v860, %v859
        %v906 = vpack.c.b16 %v862, %v861
        %v907 = vpack.c.b16 %v864, %v863
        %v908 = vpack.c.b16 %v866, %v865
        %v909 = vpack.c.b16 %v868, %v867
        %v910 = vpack.c.b16 %v870, %v869
        %v911 = vpack.c.b16 %v872, %v871
        %v912 = vpack.c.b16 %v874, %v873
        %v913 = vpack.c.b16 %v876, %v875
        %v914 = vpack.c.b16 %v878, %v877
        %v915 = vpack.c.b16 %v880, %v879
        %v916 = vpack.c.b16 %v882, %v881
        %v917 = vpack.c.b16 %v884, %v883
        %v918 = vpack.c.b16 %v886, %v885
        %v919 = vpack.c.b16 %v888, %v887
        %v920 = vpack.c.b16 %v890, %v889
        %v921 = vpack.c.b16 %v892, %v891
        %v922 = vpack.c.b16 %v894, %v893
        %v923 = vpack.c.b16 %v896, %v895
        %v924 = vpack.c.b16 %v898, %v897
        %v925 = vpack.c.b16 %v900, %v899
        %v926 = vpack.c.b16 %v902, %v901
        %951 = vmatprep.subr.bf16.mxu0 0
        %952 = vmatpush1.bf16.msra.mxu0 %v903
        %953 = vmatprep.subr.bf16.mxu0 0
        %954 = vmatpush1.bf16.msra.mxu0 %v904
        %955 = vmatprep.subr.bf16.mxu0 0
        %956 = vmatpush1.bf16.msra.mxu0 %v905
        %957 = vmatprep.subr.bf16.mxu0 0
        %958 = vmatpush1.bf16.msra.mxu0 %v906
        %959 = vmatprep.subr.bf16.mxu0 0
        %960 = vmatpush1.bf16.msra.mxu0 %v907
        %961 = vmatprep.subr.bf16.mxu0 0
        %962 = vmatpush1.bf16.msra.mxu0 %v908
        %963 = vmatprep.subr.bf16.mxu0 0
        %964 = vmatpush1.bf16.msra.mxu0 %v909
        %965 = vmatprep.subr.bf16.mxu0 0
        %966 = vmatpush1.bf16.msra.mxu0 %v910
        %967 = vmatprep.subr.bf16.mxu0 0
        %968 = vmatpush1.bf16.msra.mxu0 %v911
        %969 = vmatprep.subr.bf16.mxu0 0
        %970 = vmatpush1.bf16.msra.mxu0 %v912
        %971 = vmatprep.subr.bf16.mxu0 0
        %972 = vmatpush1.bf16.msra.mxu0 %v913
        %973 = vmatprep.subr.bf16.mxu0 0
        %974 = vmatpush1.bf16.msra.mxu0 %v914
        %975 = vmatprep.subr.bf16.mxu0 0
        %976 = vmatpush1.bf16.msra.mxu0 %v915
        %977 = vmatprep.subr.bf16.mxu0 0
        %978 = vmatpush1.bf16.msra.mxu0 %v916
        %979 = vmatprep.subr.bf16.mxu0 0
        %980 = vmatpush1.bf16.msra.mxu0 %v917
        %981 = vmatprep.subr.bf16.mxu0 0
        %982 = vmatpush1.bf16.msra.mxu0 %v918
        %983 = vmatprep.mubr.bf16.mxu0 %v712
        %984 = vmatmul.mubr.bf16.gmra.mrb[0].mxu0 %v711
        %v985 = vpop.f32.mrb[0].mxu0
        %v986 = vadd.f32 0.0, %v985
        %v987 = vpop.f32.mrb[0].mxu0
        %v988 = vpop.f32.mrb[0].mxu0
        %v989 = vadd.f32 0.0, %v988
        %v990 = vpop.f32.mrb[0].mxu0
        %991 = vmatprep.mubr.bf16.mxu0 %v715
        %992 = vmatmul.mubr.bf16.gmra.mrb[0].mxu0 %v714
        %v993 = vpop.f32.mrb[0].mxu0
        %v994 = vadd.f32 0.0, %v993
        %v995 = vpop.f32.mrb[0].mxu0
        %v996 = vpop.f32.mrb[0].mxu0
        %v997 = vadd.f32 0.0, %v996
        %v998 = vpop.f32.mrb[0].mxu0
        %999 = vmatprep.mubr.bf16.mxu0 %v718
        %1000 = vmatmul.mubr.bf16.gmra.mrb[0].mxu0 %v717
        %v1001 = vpop.f32.mrb[0].mxu0
        %v1002 = vadd.f32 0.0, %v1001
        %v1003 = vpop.f32.mrb[0].mxu0
        %v1004 = vpop.f32.mrb[0].mxu0
        %v1005 = vadd.f32 0.0, %v1004
        %v1006 = vpop.f32.mrb[0].mxu0
        %1007 = vmatprep.mubr.bf16.mxu0 %v721
        %1008 = vmatmul.mubr.bf16.gmra.mrb[0].mxu0 %v720
        %v1009 = vpop.f32.mrb[0].mxu0
        %v1010 = vadd.f32 0.0, %v1009
        %v1011 = vpop.f32.mrb[0].mxu0
        %v1012 = vpop.f32.mrb[0].mxu0
        %v1013 = vadd.f32 0.0, %v1012
        %v1014 = vpop.f32.mrb[0].mxu0
        %1015 = vmatprep.mubr.bf16.mxu0 %v724
        %1016 = vmatmul.mubr.bf16.gmra.mrb[0].mxu0 %v723
        %v1017 = vpop.f32.mrb[0].mxu0
        %v1018 = vadd.f32 0.0, %v1017
        %v1019 = vpop.f32.mrb[0].mxu0
        %v1020 = vpop.f32.mrb[0].mxu0
        %v1021 = vadd.f32 0.0, %v1020
        %v1022 = vpop.f32.mrb[0].mxu0
        %1023 = vmatprep.mubr.bf16.mxu0 %v727
        %1024 = vmatmul.mubr.bf16.gmra.mrb[0].mxu0 %v726
        %v1025 = vpop.f32.mrb[0].mxu0
        %v1026 = vadd.f32 0.0, %v1025
        %v1027 = vpop.f32.mrb[0].mxu0
        %v1028 = vpop.f32.mrb[0].mxu0
        %v1029 = vadd.f32 0.0, %v1028
        %v1030 = vpop.f32.mrb[0].mxu0
        %1031 = vmatprep.mubr.bf16.mxu0 %v730
        %1032 = vmatmul.mubr.bf16.gmra.mrb[0].mxu0 %v729
        %v1033 = vpop.f32.mrb[0].mxu0
        %v1034 = vadd.f32 0.0, %v1033
        %v1035 = vpop.f32.mrb[0].mxu0
        %v1036 = vpop.f32.mrb[0].mxu0
        %v1037 = vadd.f32 0.0, %v1036
        %v1038 = vpop.f32.mrb[0].mxu0
        %1039 = vmatprep.mubr.bf16.mxu0 %v733
        %1040 = vmatmul.mubr.bf16.gmra.mrb[0].mxu0 %v732
        %v1041 = vpop.f32.mrb[0].mxu0
        %v1042 = vadd.f32 0.0, %v1041
        %v1043 = vpop.f32.mrb[0].mxu0
        %v1044 = vpop.f32.mrb[0].mxu0
        %v1045 = vadd.f32 0.0, %v1044
        %v1046 = vpop.f32.mrb[0].mxu0
        %1047 = vmatprep.mubr.bf16.mxu0 %v736
        %1048 = vmatmul.mubr.bf16.gmra.mrb[0].mxu0 %v735
        %v1049 = vpop.f32.mrb[0].mxu0
        %v1050 = vadd.f32 0.0, %v1049
        %v1051 = vpop.f32.mrb[0].mxu0
        %v1052 = vpop.f32.mrb[0].mxu0
        %v1053 = vadd.f32 0.0, %v1052
        %v1054 = vpop.f32.mrb[0].mxu0
        %1055 = vmatprep.mubr.bf16.mxu0 %v739
        %1056 = vmatmul.mubr.bf16.gmra.mrb[0].mxu0 %v738
        %v1057 = vpop.f32.mrb[0].mxu0
        %v1058 = vadd.f32 0.0, %v1057
        %v1059 = vpop.f32.mrb[0].mxu0
        %v1060 = vpop.f32.mrb[0].mxu0
        %v1061 = vadd.f32 0.0, %v1060
        %v1062 = vpop.f32.mrb[0].mxu0
        %1063 = vmatprep.mubr.bf16.mxu0 %v742
        %1064 = vmatmul.mubr.bf16.gmra.mrb[0].mxu0 %v741
        %v1065 = vpop.f32.mrb[0].mxu0
        %v1066 = vadd.f32 0.0, %v1065
        %v1067 = vpop.f32.mrb[0].mxu0
        %v1068 = vpop.f32.mrb[0].mxu0
        %v1069 = vadd.f32 0.0, %v1068
        %v1070 = vpop.f32.mrb[0].mxu0
        %1071 = vmatprep.mubr.bf16.mxu0 %v745
        %1072 = vmatmul.mubr.bf16.gmra.mrb[0].mxu0 %v744
        %v1073 = vpop.f32.mrb[0].mxu0
        %v1074 = vadd.f32 0.0, %v1073
        %v1075 = vpop.f32.mrb[0].mxu0
        %v1076 = vpop.f32.mrb[0].mxu0
        %v1077 = vadd.f32 0.0, %v1076
        %v1078 = vpop.f32.mrb[0].mxu0
        %1079 = vmatprep.mubr.bf16.mxu0 %v748
        %1080 = vmatmul.mubr.bf16.gmra.mrb[0].mxu0 %v747
        %v1081 = vpop.f32.mrb[0].mxu0
        %v1082 = vadd.f32 0.0, %v1081
        %v1083 = vpop.f32.mrb[0].mxu0
        %v1084 = vpop.f32.mrb[0].mxu0
        %v1085 = vadd.f32 0.0, %v1084
        %v1086 = vpop.f32.mrb[0].mxu0
        %1087 = vmatprep.mubr.bf16.mxu0 %v751
        %1088 = vmatmul.mubr.bf16.gmra.mrb[0].mxu0 %v750
        %v1089 = vpop.f32.mrb[0].mxu0
        %v1090 = vadd.f32 0.0, %v1089
        %v1091 = vpop.f32.mrb[0].mxu0
        %v1092 = vpop.f32.mrb[0].mxu0
        %v1093 = vadd.f32 0.0, %v1092
        %v1094 = vpop.f32.mrb[0].mxu0
        %1095 = vmatprep.mubr.bf16.mxu0 %v754
        %1096 = vmatmul.mubr.bf16.gmra.mrb[0].mxu0 %v753
        %v1097 = vpop.f32.mrb[0].mxu0
        %v1098 = vadd.f32 0.0, %v1097
        %v1099 = vpop.f32.mrb[0].mxu0
        %v1100 = vpop.f32.mrb[0].mxu0
        %v1101 = vadd.f32 0.0, %v1100
        %v1102 = vpop.f32.mrb[0].mxu0
        %1103 = vmatprep.mubr.bf16.mxu0 %v757
        %1104 = vmatmul.mubr.bf16.gmra.mrb[0].mxu0 %v756
        %v1105 = vpop.f32.mrb[0].mxu0
        %v1106 = vadd.f32 0.0, %v1105
        %v1107 = vpop.f32.mrb[0].mxu0
        %v1108 = vpop.f32.mrb[0].mxu0
        %v1109 = vadd.f32 0.0, %v1108
        %v1110 = vpop.f32.mrb[0].mxu0
        %1111 = vdwg.mxu0
        %1112 = vmatprep.subr.bf16.mxu0 0
        %1113 = vmatpush1.bf16.msra.mxu0 %v919
        %1114 = vmatprep.subr.bf16.mxu0 0
        %1115 = vmatpush1.bf16.msra.mxu0 %v920
        %1116 = vmatprep.subr.bf16.mxu0 0
        %1117 = vmatpush1.bf16.msra.mxu0 %v921
        %1118 = vmatprep.subr.bf16.mxu0 0
        %1119 = vmatpush1.bf16.msra.mxu0 %v922
        %1120 = vmatprep.subr.bf16.mxu0 0
        %1121 = vmatpush1.bf16.msra.mxu0 %v923
        %1122 = vmatprep.subr.bf16.mxu0 0
        %1123 = vmatpush1.bf16.msra.mxu0 %v924
        %1124 = vmatprep.subr.bf16.mxu0 0
        %1125 = vmatpush1.bf16.msra.mxu0 %v925
        %1126 = vmatprep.subr.bf16.mxu0 0
        %1127 = vmatpush1.bf16.msra.mxu0 %v926
        %1128 = vmatprep.subr.bf16.mxu0 0
        %1129 = vmatpush1.bf16.msra.mxu0 0
        %1130 = vmatprep.subr.bf16.mxu0 0
        %1131 = vmatpush1.bf16.msra.mxu0 0
        %1132 = vmatprep.subr.bf16.mxu0 0
        %1133 = vmatpush1.bf16.msra.mxu0 0
        %1134 = vmatprep.subr.bf16.mxu0 0
        %1135 = vmatpush1.bf16.msra.mxu0 0
        %1136 = vmatprep.subr.bf16.mxu0 0
        %1137 = vmatpush1.bf16.msra.mxu0 0
        %1138 = vmatprep.subr.bf16.mxu0 0
        %1139 = vmatpush1.bf16.msra.mxu0 0
        %1140 = vmatprep.subr.bf16.mxu0 0
        %1141 = vmatpush1.bf16.msra.mxu0 0
        %1142 = vmatprep.subr.bf16.mxu0 0
        %1143 = vmatpush1.bf16.msra.mxu0 0
        %1144 = vmatprep.mubr.bf16.mxu0 0
        %1145 = vmatmul.mubr.bf16.gmra.mrb[0].mxu0 %v713
        %v1146 = vpop.f32.mrb[0].mxu0
        %v1147 = vadd.f32 %v986, %v1146
        %v1148 = vpop.f32.mrb[0].mxu0
        %v1149 = vpop.f32.mrb[0].mxu0
        %v1150 = vadd.f32 %v989, %v1149
        %v1151 = vpop.f32.mrb[0].mxu0
        %1152 = vmatprep.mubr.bf16.mxu0 0
        %1153 = vmatmul.mubr.bf16.gmra.mrb[0].mxu0 %v716
        %v1154 = vpop.f32.mrb[0].mxu0
        %v1155 = vadd.f32 %v994, %v1154
        %v1156 = vpop.f32.mrb[0].mxu0
        %v1157 = vpop.f32.mrb[0].mxu0
        %v1158 = vadd.f32 %v997, %v1157
        %v1159 = vpop.f32.mrb[0].mxu0
        %1160 = vmatprep.mubr.bf16.mxu0 0
        %1161 = vmatmul.mubr.bf16.gmra.mrb[0].mxu0 %v719
        %v1162 = vpop.f32.mrb[0].mxu0
        %v1163 = vadd.f32 %v1002, %v1162
        %v1164 = vpop.f32.mrb[0].mxu0
        %v1165 = vpop.f32.mrb[0].mxu0
        %v1166 = vadd.f32 %v1005, %v1165
        %v1167 = vpop.f32.mrb[0].mxu0
        %1168 = vmatprep.mubr.bf16.mxu0 0
        %1169 = vmatmul.mubr.bf16.gmra.mrb[0].mxu0 %v722
        %v1170 = vpop.f32.mrb[0].mxu0
        %v1171 = vadd.f32 %v1010, %v1170
        %v1172 = vpop.f32.mrb[0].mxu0
        %v1173 = vpop.f32.mrb[0].mxu0
        %v1174 = vadd.f32 %v1013, %v1173
        %v1175 = vpop.f32.mrb[0].mxu0
        %1176 = vmatprep.mubr.bf16.mxu0 0
        %1177 = vmatmul.mubr.bf16.gmra.mrb[0].mxu0 %v725
        %v1178 = vpop.f32.mrb[0].mxu0
        %v1179 = vadd.f32 %v1018, %v1178
        %v1180 = vpop.f32.mrb[0].mxu0
        %v1181 = vpop.f32.mrb[0].mxu0
        %v1182 = vadd.f32 %v1021, %v1181
        %v1183 = vpop.f32.mrb[0].mxu0
        %1184 = vmatprep.mubr.bf16.mxu0 0
        %1185 = vmatmul.mubr.bf16.gmra.mrb[0].mxu0 %v728
        %v1186 = vpop.f32.mrb[0].mxu0
        %v1187 = vadd.f32 %v1026, %v1186
        %v1188 = vpop.f32.mrb[0].mxu0
        %v1189 = vpop.f32.mrb[0].mxu0
        %v1190 = vadd.f32 %v1029, %v1189
        %v1191 = vpop.f32.mrb[0].mxu0
        %1192 = vmatprep.mubr.bf16.mxu0 0
        %1193 = vmatmul.mubr.bf16.gmra.mrb[0].mxu0 %v731
        %v1194 = vpop.f32.mrb[0].mxu0
        %v1195 = vadd.f32 %v1034, %v1194
        %v1196 = vpop.f32.mrb[0].mxu0
        %v1197 = vpop.f32.mrb[0].mxu0
        %v1198 = vadd.f32 %v1037, %v1197
        %v1199 = vpop.f32.mrb[0].mxu0
        %1200 = vmatprep.mubr.bf16.mxu0 0
        %1201 = vmatmul.mubr.bf16.gmra.mrb[0].mxu0 %v734
        %v1202 = vpop.f32.mrb[0].mxu0
        %v1203 = vadd.f32 %v1042, %v1202
        %v1204 = vpop.f32.mrb[0].mxu0
        %v1205 = vpop.f32.mrb[0].mxu0
        %v1206 = vadd.f32 %v1045, %v1205
        %v1207 = vpop.f32.mrb[0].mxu0
        %1208 = vmatprep.mubr.bf16.mxu0 0
        %1209 = vmatmul.mubr.bf16.gmra.mrb[0].mxu0 %v737
        %v1210 = vpop.f32.mrb[0].mxu0
        %v1211 = vadd.f32 %v1050, %v1210
        %v1212 = vpop.f32.mrb[0].mxu0
        %v1213 = vpop.f32.mrb[0].mxu0
        %v1214 = vadd.f32 %v1053, %v1213
        %v1215 = vpop.f32.mrb[0].mxu0
        %1216 = vmatprep.mubr.bf16.mxu0 0
        %1217 = vmatmul.mubr.bf16.gmra.mrb[0].mxu0 %v740
        %v1218 = vpop.f32.mrb[0].mxu0
        %v1219 = vadd.f32 %v1058, %v1218
        %v1220 = vpop.f32.mrb[0].mxu0
        %v1221 = vpop.f32.mrb[0].mxu0
        %v1222 = vadd.f32 %v1061, %v1221
        %v1223 = vpop.f32.mrb[0].mxu0
        %1224 = vmatprep.mubr.bf16.mxu0 0
        %1225 = vmatmul.mubr.bf16.gmra.mrb[0].mxu0 %v743
        %v1226 = vpop.f32.mrb[0].mxu0
        %v1227 = vadd.f32 %v1066, %v1226
        %v1228 = vpop.f32.mrb[0].mxu0
        %v1229 = vpop.f32.mrb[0].mxu0
        %v1230 = vadd.f32 %v1069, %v1229
        %v1231 = vpop.f32.mrb[0].mxu0
        %1232 = vmatprep.mubr.bf16.mxu0 0
        %1233 = vmatmul.mubr.bf16.gmra.mrb[0].mxu0 %v746
        %v1234 = vpop.f32.mrb[0].mxu0
        %v1235 = vadd.f32 %v1074, %v1234
        %v1236 = vpop.f32.mrb[0].mxu0
        %v1237 = vpop.f32.mrb[0].mxu0
        %v1238 = vadd.f32 %v1077, %v1237
        %v1239 = vpop.f32.mrb[0].mxu0
        %1240 = vmatprep.mubr.bf16.mxu0 0
        %1241 = vmatmul.mubr.bf16.gmra.mrb[0].mxu0 %v749
        %v1242 = vpop.f32.mrb[0].mxu0
        %v1243 = vadd.f32 %v1082, %v1242
        %v1244 = vpop.f32.mrb[0].mxu0
        %v1245 = vpop.f32.mrb[0].mxu0
        %v1246 = vadd.f32 %v1085, %v1245
        %v1247 = vpop.f32.mrb[0].mxu0
        %1248 = vmatprep.mubr.bf16.mxu0 0
        %1249 = vmatmul.mubr.bf16.gmra.mrb[0].mxu0 %v752
        %v1250 = vpop.f32.mrb[0].mxu0
        %v1251 = vadd.f32 %v1090, %v1250
        %v1252 = vpop.f32.mrb[0].mxu0
        %v1253 = vpop.f32.mrb[0].mxu0
        %v1254 = vadd.f32 %v1093, %v1253
        %v1255 = vpop.f32.mrb[0].mxu0
        %1256 = vmatprep.mubr.bf16.mxu0 0
        %1257 = vmatmul.mubr.bf16.gmra.mrb[0].mxu0 %v755
        %v1258 = vpop.f32.mrb[0].mxu0
        %v1259 = vadd.f32 %v1098, %v1258
        %v1260 = vpop.f32.mrb[0].mxu0
        %v1261 = vpop.f32.mrb[0].mxu0
        %v1262 = vadd.f32 %v1101, %v1261
        %v1263 = vpop.f32.mrb[0].mxu0
        %1264 = vmatprep.mubr.bf16.mxu0 0
        %1265 = vmatmul.mubr.bf16.gmra.mrb[0].mxu0 %v758
        %v1266 = vpop.f32.mrb[0].mxu0
        %v1267 = vadd.f32 %v1106, %v1266
        %v1268 = vpop.f32.mrb[0].mxu0
        %v1269 = vpop.f32.mrb[0].mxu0
        %v1270 = vadd.f32 %v1109, %v1269
        %v1271 = vpop.f32.mrb[0].mxu0
        %1272 = vdwg.mxu0
        %v1273 = vadd.f32 %v407, %v1147
        %v1274 = vadd.f32 %v408, %v1150
        %v1275 = vadd.f32 %v409, %v1155
        %v1276 = vadd.f32 %v410, %v1158
        %v1277 = vadd.f32 %v411, %v1163
        %v1278 = vadd.f32 %v412, %v1166
        %v1279 = vadd.f32 %v413, %v1171
        %v1280 = vadd.f32 %v414, %v1174
        %v1281 = vadd.f32 %v415, %v1179
        %v1282 = vadd.f32 %v416, %v1182
        %v1283 = vadd.f32 %v417, %v1187
        %v1284 = vadd.f32 %v418, %v1190
        %v1285 = vadd.f32 %v419, %v1195
        %v1286 = vadd.f32 %v420, %v1198
        %v1287 = vadd.f32 %v421, %v1203
        %v1288 = vadd.f32 %v422, %v1206
        %v1289 = vadd.f32 %v423, %v1211
        %v1290 = vadd.f32 %v424, %v1214
        %v1291 = vadd.f32 %v425, %v1219
        %v1292 = vadd.f32 %v426, %v1222
        %v1293 = vadd.f32 %v427, %v1227
        %v1294 = vadd.f32 %v428, %v1230
        %v1295 = vadd.f32 %v429, %v1235
        %v1296 = vadd.f32 %v430, %v1238
        %v1297 = vadd.f32 %v431, %v1243
        %v1298 = vadd.f32 %v432, %v1246
        %v1299 = vadd.f32 %v433, %v1251
        %v1300 = vadd.f32 %v434, %v1254
        %v1301 = vadd.f32 %v435, %v1259
        %v1302 = vadd.f32 %v436, %v1262
        %v1303 = vadd.f32 %v437, %v1267
        %v1304 = vadd.f32 %v438, %v1270
        %1305 = vst [vmem:[#allocation2] sm:$0xff] %v1273
        %1306 = vst [vmem:[#allocation2 + $0x8] sm:$0xff] %v1274
        %1307 = vst [vmem:[#allocation2 + $0x10] sm:$0xff] %v1275
        %1308 = vst [vmem:[#allocation2 + $0x18] sm:$0xff] %v1276
        %1309 = vst [vmem:[#allocation2 + $0x20] sm:$0xff] %v1277
        %1310 = vst [vmem:[#allocation2 + $0x28] sm:$0xff] %v1278
        %1311 = vst [vmem:[#allocation2 + $0x30] sm:$0xff] %v1279
        %1312 = vst [vmem:[#allocation2 + $0x38] sm:$0xff] %v1280
        %1313 = vst [vmem:[#allocation2 + $0x40] sm:$0xff] %v1281
        %1314 = vst [vmem:[#allocation2 + $0x48] sm:$0xff] %v1282
        %1315 = vst [vmem:[#allocation2 + $0x50] sm:$0xff] %v1283
        %1316 = vst [vmem:[#allocation2 + $0x58] sm:$0xff] %v1284
        %1317 = vst [vmem:[#allocation2 + $0x60] sm:$0xff] %v1285
        %1318 = vst [vmem:[#allocation2 + $0x68] sm:$0xff] %v1286
        %1319 = vst [vmem:[#allocation2 + $0x70] sm:$0xff] %v1287
        %1320 = vst [vmem:[#allocation2 + $0x78] sm:$0xff] %v1288
        %1321 = vst [vmem:[#allocation2 + $0x80] sm:$0xff] %v1289
        %1322 = vst [vmem:[#allocation2 + $0x88] sm:$0xff] %v1290
        %1323 = vst [vmem:[#allocation2 + $0x90] sm:$0xff] %v1291
        %1324 = vst [vmem:[#allocation2 + $0x98] sm:$0xff] %v1292
        %1325 = vst [vmem:[#allocation2 + $0xa0] sm:$0xff] %v1293
        %1326 = vst [vmem:[#allocation2 + $0xa8] sm:$0xff] %v1294
        %1327 = vst [vmem:[#allocation2 + $0xb0] sm:$0xff] %v1295
        %1328 = vst [vmem:[#allocation2 + $0xb8] sm:$0xff] %v1296
        %1329 = vst [vmem:[#allocation2 + $0xc0] sm:$0xff] %v1297
        %1330 = vst [vmem:[#allocation2 + $0xc8] sm:$0xff] %v1298
        %1331 = vst [vmem:[#allocation2 + $0xd0] sm:$0xff] %v1299
        %1332 = vst [vmem:[#allocation2 + $0xd8] sm:$0xff] %v1300
        %1333 = vst [vmem:[#allocation2 + $0xe0] sm:$0xff] %v1301
        %1334 = vst [vmem:[#allocation2 + $0xe8] sm:$0xff] %v1302
        %1335 = vst [vmem:[#allocation2 + $0xf0] sm:$0xff] %v1303
        %1336 = vst [vmem:[#allocation2 + $0xf8] sm:$0xff] %v1304
        // Predicated region
        $region69: #{tpu_custom_call.1} parent=47 // pred_check
          %p1337 = pneg %p371
        $region70: #{tpu_custom_call.1} parent=47 // pred_check_branch
          %1339 = sbr.rel (%p1337) target = $region72
        $region71: #{tpu_custom_call.1} parent=47 // pred_region
          %v1340 = vld [vmem:[#allocation2] sm:$0xff]
          %v1341 = vld [vmem:[#allocation2 + $0x8] sm:$0xff]
          %v1342 = vld [vmem:[#allocation2 + $0x10] sm:$0xff]
          %v1343 = vld [vmem:[#allocation2 + $0x18] sm:$0xff]
          %v1344 = vld [vmem:[#allocation2 + $0x20] sm:$0xff]
          %v1345 = vld [vmem:[#allocation2 + $0x28] sm:$0xff]
          %v1346 = vld [vmem:[#allocation2 + $0x30] sm:$0xff]
          %v1347 = vld [vmem:[#allocation2 + $0x38] sm:$0xff]
          %v1348 = vld [vmem:[#allocation2 + $0x40] sm:$0xff]
          %v1349 = vld [vmem:[#allocation2 + $0x48] sm:$0xff]
          %v1350 = vld [vmem:[#allocation2 + $0x50] sm:$0xff]
          %v1351 = vld [vmem:[#allocation2 + $0x58] sm:$0xff]
          %v1352 = vld [vmem:[#allocation2 + $0x60] sm:$0xff]
          %v1353 = vld [vmem:[#allocation2 + $0x68] sm:$0xff]
          %v1354 = vld [vmem:[#allocation2 + $0x70] sm:$0xff]
          %v1355 = vld [vmem:[#allocation2 + $0x78] sm:$0xff]
          %v1356 = vld [vmem:[#allocation2 + $0x80] sm:$0xff]
          %v1357 = vld [vmem:[#allocation2 + $0x88] sm:$0xff]
          %v1358 = vld [vmem:[#allocation2 + $0x90] sm:$0xff]
          %v1359 = vld [vmem:[#allocation2 + $0x98] sm:$0xff]
          %v1360 = vld [vmem:[#allocation2 + $0xa0] sm:$0xff]
          %v1361 = vld [vmem:[#allocation2 + $0xa8] sm:$0xff]
          %v1362 = vld [vmem:[#allocation2 + $0xb0] sm:$0xff]
          %v1363 = vld [vmem:[#allocation2 + $0xb8] sm:$0xff]
          %v1364 = vld [vmem:[#allocation2 + $0xc0] sm:$0xff]
          %v1365 = vld [vmem:[#allocation2 + $0xc8] sm:$0xff]
          %v1366 = vld [vmem:[#allocation2 + $0xd0] sm:$0xff]
          %v1367 = vld [vmem:[#allocation2 + $0xd8] sm:$0xff]
          %v1368 = vld [vmem:[#allocation2 + $0xe0] sm:$0xff]
          %v1369 = vld [vmem:[#allocation2 + $0xe8] sm:$0xff]
          %v1370 = vld [vmem:[#allocation2 + $0xf0] sm:$0xff]
          %v1371 = vld [vmem:[#allocation2 + $0xf8] sm:$0xff]
          %v1372 = vld [vmem:[%s2] sm:$0x1]
          %v1374 = vlaneseq
          %v1375 = vshrl.u32 %v1374, 7
          %v1376 = vsub.s32 0, %v1375
          %v1377 = vrot.slane %v1372, %v1376
          %v1379 = vadd.f32 %v1340, %v1377
          %v1380 = vadd.f32 %v1341, %v1377
          %v1381 = vadd.f32 %v1342, %v1377
          %v1382 = vadd.f32 %v1343, %v1377
          %v1383 = vadd.f32 %v1344, %v1377
          %v1384 = vadd.f32 %v1345, %v1377
          %v1385 = vadd.f32 %v1346, %v1377
          %v1386 = vadd.f32 %v1347, %v1377
          %v1387 = vadd.f32 %v1348, %v1377
          %v1388 = vadd.f32 %v1349, %v1377
          %v1389 = vadd.f32 %v1350, %v1377
          %v1390 = vadd.f32 %v1351, %v1377
          %v1391 = vadd.f32 %v1352, %v1377
          %v1392 = vadd.f32 %v1353, %v1377
          %v1393 = vadd.f32 %v1354, %v1377
          %v1394 = vadd.f32 %v1355, %v1377
          %v1395 = vadd.f32 %v1356, %v1377
          %v1396 = vadd.f32 %v1357, %v1377
          %v1397 = vadd.f32 %v1358, %v1377
          %v1398 = vadd.f32 %v1359, %v1377
          %v1399 = vadd.f32 %v1360, %v1377
          %v1400 = vadd.f32 %v1361, %v1377
          %v1401 = vadd.f32 %v1362, %v1377
          %v1402 = vadd.f32 %v1363, %v1377
          %v1403 = vadd.f32 %v1364, %v1377
          %v1404 = vadd.f32 %v1365, %v1377
          %v1405 = vadd.f32 %v1366, %v1377
          %v1406 = vadd.f32 %v1367, %v1377
          %v1407 = vadd.f32 %v1368, %v1377
          %v1408 = vadd.f32 %v1369, %v1377
          %v1409 = vadd.f32 %v1370, %v1377
          %v1410 = vadd.f32 %v1371, %v1377
          %v1411 = vmax.f32 %v1379, 0.0
          %v1412 = vmax.f32 %v1380, 0.0
          %v1413 = vmax.f32 %v1381, 0.0
          %v1414 = vmax.f32 %v1382, 0.0
          %v1415 = vmax.f32 %v1383, 0.0
          %v1416 = vmax.f32 %v1384, 0.0
          %v1417 = vmax.f32 %v1385, 0.0
          %v1418 = vmax.f32 %v1386, 0.0
          %v1419 = vmax.f32 %v1387, 0.0
          %v1420 = vmax.f32 %v1388, 0.0
          %v1421 = vmax.f32 %v1389, 0.0
          %v1422 = vmax.f32 %v1390, 0.0
          %v1423 = vmax.f32 %v1391, 0.0
          %v1424 = vmax.f32 %v1392, 0.0
          %v1425 = vmax.f32 %v1393, 0.0
          %v1426 = vmax.f32 %v1394, 0.0
          %v1427 = vmax.f32 %v1395, 0.0
          %v1428 = vmax.f32 %v1396, 0.0
          %v1429 = vmax.f32 %v1397, 0.0
          %v1430 = vmax.f32 %v1398, 0.0
          %v1431 = vmax.f32 %v1399, 0.0
          %v1432 = vmax.f32 %v1400, 0.0
          %v1433 = vmax.f32 %v1401, 0.0
          %v1434 = vmax.f32 %v1402, 0.0
          %v1435 = vmax.f32 %v1403, 0.0
          %v1436 = vmax.f32 %v1404, 0.0
          %v1437 = vmax.f32 %v1405, 0.0
          %v1438 = vmax.f32 %v1406, 0.0
          %v1439 = vmax.f32 %v1407, 0.0
          %v1440 = vmax.f32 %v1408, 0.0
          %v1441 = vmax.f32 %v1409, 0.0
          %v1442 = vmax.f32 %v1410, 0.0
          %v1443 = vpack.c.bf16 %v1412, %v1411
          %v1444 = vpack.c.bf16 %v1414, %v1413
          %v1445 = vpack.c.bf16 %v1416, %v1415
          %v1446 = vpack.c.bf16 %v1418, %v1417
          %v1447 = vpack.c.bf16 %v1420, %v1419
          %v1448 = vpack.c.bf16 %v1422, %v1421
          %v1449 = vpack.c.bf16 %v1424, %v1423
          %v1450 = vpack.c.bf16 %v1426, %v1425
          %v1451 = vpack.c.bf16 %v1428, %v1427
          %v1452 = vpack.c.bf16 %v1430, %v1429
          %v1453 = vpack.c.bf16 %v1432, %v1431
          %v1454 = vpack.c.bf16 %v1434, %v1433
          %v1455 = vpack.c.bf16 %v1436, %v1435
          %v1456 = vpack.c.bf16 %v1438, %v1437
          %v1457 = vpack.c.bf16 %v1440, %v1439
          %v1458 = vpack.c.bf16 %v1442, %v1441
          %v1459 = vld [vmem:[#allocation8] sm:$0xf]
          %v1460 = vld [vmem:[#allocation8 + $0x4] sm:$0xf]
          %v1461 = vld [vmem:[#allocation8 + $0x8] sm:$0xf]
          %v1462 = vld [vmem:[#allocation8 + $0xc] sm:$0xf]
          %v1463 = vld [vmem:[#allocation8 + $0x10] sm:$0xf]
          %v1464 = vld [vmem:[#allocation8 + $0x14] sm:$0xf]
          %v1465 = vld [vmem:[#allocation8 + $0x18] sm:$0xf]
          %v1466 = vld [vmem:[#allocation8 + $0x1c] sm:$0xf]
          %v1467 = vld [vmem:[#allocation8 + $0x20] sm:$0xf]
          %v1468 = vld [vmem:[#allocation8 + $0x24] sm:$0xf]
          %v1469 = vld [vmem:[#allocation8 + $0x28] sm:$0xf]
          %v1470 = vld [vmem:[#allocation8 + $0x2c] sm:$0xf]
          %v1471 = vld [vmem:[#allocation8 + $0x30] sm:$0xf]
          %v1472 = vld [vmem:[#allocation8 + $0x34] sm:$0xf]
          %v1473 = vld [vmem:[#allocation8 + $0x38] sm:$0xf]
          %v1474 = vld [vmem:[#allocation8 + $0x3c] sm:$0xf]
          %v1475 = vld [vmem:[%s4] sm:$0x1]
          %v1477 = vlaneseq
          %v1478 = vshrl.u32 %v1477, 7
          %v1479 = vsub.s32 0, %v1478
          %v1480 = vrot.slane %v1475, %v1479
          %v1498 = vunpack.c.l.b16 %v1459
          %v1499 = vunpack.c.l.b16 %v1460
          %v1500 = vunpack.c.l.b16 %v1461
          %v1501 = vunpack.c.l.b16 %v1462
          %v1502 = vunpack.c.l.b16 %v1463
          %v1503 = vunpack.c.l.b16 %v1464
          %v1504 = vunpack.c.l.b16 %v1465
          %v1505 = vunpack.c.l.b16 %v1466
          %v1506 = vunpack.c.l.b16 %v1467
          %v1507 = vunpack.c.l.b16 %v1468
          %v1508 = vunpack.c.l.b16 %v1469
          %v1509 = vunpack.c.l.b16 %v1470
          %v1510 = vunpack.c.l.b16 %v1471
          %v1511 = vunpack.c.l.b16 %v1472
          %v1512 = vunpack.c.l.b16 %v1473
          %v1513 = vunpack.c.l.b16 %v1474
          %v1514 = vpack.c.b16 %v1499, %v1498
          %v1515 = vpack.c.b16 %v1501, %v1500
          %v1516 = vpack.c.b16 %v1503, %v1502
          %v1517 = vpack.c.b16 %v1505, %v1504
          %v1518 = vpack.c.b16 %v1507, %v1506
          %v1519 = vpack.c.b16 %v1509, %v1508
          %v1520 = vpack.c.b16 %v1511, %v1510
          %v1521 = vpack.c.b16 %v1513, %v1512
          %1530 = vmatprep.subr.bf16.mxu0 0
          %1531 = vmatpush1.bf16.msra.mxu0 %v1514
          %1532 = vmatprep.subr.bf16.mxu0 0
          %1533 = vmatpush1.bf16.msra.mxu0 %v1515
          %1534 = vmatprep.subr.bf16.mxu0 0
          %1535 = vmatpush1.bf16.msra.mxu0 %v1516
          %1536 = vmatprep.subr.bf16.mxu0 0
          %1537 = vmatpush1.bf16.msra.mxu0 %v1517
          %1538 = vmatprep.subr.bf16.mxu0 0
          %1539 = vmatpush1.bf16.msra.mxu0 %v1518
          %1540 = vmatprep.subr.bf16.mxu0 0
          %1541 = vmatpush1.bf16.msra.mxu0 %v1519
          %1542 = vmatprep.subr.bf16.mxu0 0
          %1543 = vmatpush1.bf16.msra.mxu0 %v1520
          %1544 = vmatprep.subr.bf16.mxu0 0
          %1545 = vmatpush1.bf16.msra.mxu0 %v1521
          %1546 = vmatprep.subr.bf16.mxu0 0
          %1547 = vmatpush1.bf16.msra.mxu0 0
          %1548 = vmatprep.subr.bf16.mxu0 0
          %1549 = vmatpush1.bf16.msra.mxu0 0
          %1550 = vmatprep.subr.bf16.mxu0 0
          %1551 = vmatpush1.bf16.msra.mxu0 0
          %1552 = vmatprep.subr.bf16.mxu0 0
          %1553 = vmatpush1.bf16.msra.mxu0 0
          %1554 = vmatprep.subr.bf16.mxu0 0
          %1555 = vmatpush1.bf16.msra.mxu0 0
          %1556 = vmatprep.subr.bf16.mxu0 0
          %1557 = vmatpush1.bf16.msra.mxu0 0
          %1558 = vmatprep.subr.bf16.mxu0 0
          %1559 = vmatpush1.bf16.msra.mxu0 0
          %1560 = vmatprep.subr.bf16.mxu0 0
          %1561 = vmatpush1.bf16.msra.mxu0 0
          %1562 = vmatprep.mubr.bf16.mxu0 0
          %1563 = vmatmul.mubr.bf16.gmra.mrb[0].mxu0 %v1443
          %v1564 = vpop.f32.mrb[0].mxu0
          %v1565 = vadd.f32 %v1480, %v1564
          %v1566 = vpop.f32.mrb[0].mxu0
          %v1567 = vpop.f32.mrb[0].mxu0
          %v1568 = vadd.f32 %v1480, %v1567
          %v1569 = vpop.f32.mrb[0].mxu0
          %1570 = vmatprep.mubr.bf16.mxu0 0
          %1571 = vmatmul.mubr.bf16.gmra.mrb[0].mxu0 %v1444
          %v1572 = vpop.f32.mrb[0].mxu0
          %v1573 = vadd.f32 %v1480, %v1572
          %v1574 = vpop.f32.mrb[0].mxu0
          %v1575 = vpop.f32.mrb[0].mxu0
          %v1576 = vadd.f32 %v1480, %v1575
          %v1577 = vpop.f32.mrb[0].mxu0
          %1578 = vmatprep.mubr.bf16.mxu0 0
          %1579 = vmatmul.mubr.bf16.gmra.mrb[0].mxu0 %v1445
          %v1580 = vpop.f32.mrb[0].mxu0
          %v1581 = vadd.f32 %v1480, %v1580
          %v1582 = vpop.f32.mrb[0].mxu0
          %v1583 = vpop.f32.mrb[0].mxu0
          %v1584 = vadd.f32 %v1480, %v1583
          %v1585 = vpop.f32.mrb[0].mxu0
          %1586 = vmatprep.mubr.bf16.mxu0 0
          %1587 = vmatmul.mubr.bf16.gmra.mrb[0].mxu0 %v1446
          %v1588 = vpop.f32.mrb[0].mxu0
          %v1589 = vadd.f32 %v1480, %v1588
          %v1590 = vpop.f32.mrb[0].mxu0
          %v1591 = vpop.f32.mrb[0].mxu0
          %v1592 = vadd.f32 %v1480, %v1591
          %v1593 = vpop.f32.mrb[0].mxu0
          %1594 = vmatprep.mubr.bf16.mxu0 0
          %1595 = vmatmul.mubr.bf16.gmra.mrb[0].mxu0 %v1447
          %v1596 = vpop.f32.mrb[0].mxu0
          %v1597 = vadd.f32 %v1480, %v1596
          %v1598 = vpop.f32.mrb[0].mxu0
          %v1599 = vpop.f32.mrb[0].mxu0
          %v1600 = vadd.f32 %v1480, %v1599
          %v1601 = vpop.f32.mrb[0].mxu0
          %1602 = vmatprep.mubr.bf16.mxu0 0
          %1603 = vmatmul.mubr.bf16.gmra.mrb[0].mxu0 %v1448
          %v1604 = vpop.f32.mrb[0].mxu0
          %v1605 = vadd.f32 %v1480, %v1604
          %v1606 = vpop.f32.mrb[0].mxu0
          %v1607 = vpop.f32.mrb[0].mxu0
          %v1608 = vadd.f32 %v1480, %v1607
          %v1609 = vpop.f32.mrb[0].mxu0
          %1610 = vmatprep.mubr.bf16.mxu0 0
          %1611 = vmatmul.mubr.bf16.gmra.mrb[0].mxu0 %v1449
          %v1612 = vpop.f32.mrb[0].mxu0
          %v1613 = vadd.f32 %v1480, %v1612
          %v1614 = vpop.f32.mrb[0].mxu0
          %v1615 = vpop.f32.mrb[0].mxu0
          %v1616 = vadd.f32 %v1480, %v1615
          %v1617 = vpop.f32.mrb[0].mxu0
          %1618 = vmatprep.mubr.bf16.mxu0 0
          %1619 = vmatmul.mubr.bf16.gmra.mrb[0].mxu0 %v1450
          %v1620 = vpop.f32.mrb[0].mxu0
          %v1621 = vadd.f32 %v1480, %v1620
          %v1622 = vpop.f32.mrb[0].mxu0
          %v1623 = vpop.f32.mrb[0].mxu0
          %v1624 = vadd.f32 %v1480, %v1623
          %v1625 = vpop.f32.mrb[0].mxu0
          %1626 = vmatprep.mubr.bf16.mxu0 0
          %1627 = vmatmul.mubr.bf16.gmra.mrb[0].mxu0 %v1451
          %v1628 = vpop.f32.mrb[0].mxu0
          %v1629 = vadd.f32 %v1480, %v1628
          %v1630 = vpop.f32.mrb[0].mxu0
          %v1631 = vpop.f32.mrb[0].mxu0
          %v1632 = vadd.f32 %v1480, %v1631
          %v1633 = vpop.f32.mrb[0].mxu0
          %1634 = vmatprep.mubr.bf16.mxu0 0
          %1635 = vmatmul.mubr.bf16.gmra.mrb[0].mxu0 %v1452
          %v1636 = vpop.f32.mrb[0].mxu0
          %v1637 = vadd.f32 %v1480, %v1636
          %v1638 = vpop.f32.mrb[0].mxu0
          %v1639 = vpop.f32.mrb[0].mxu0
          %v1640 = vadd.f32 %v1480, %v1639
          %v1641 = vpop.f32.mrb[0].mxu0
          %1642 = vmatprep.mubr.bf16.mxu0 0
          %1643 = vmatmul.mubr.bf16.gmra.mrb[0].mxu0 %v1453
          %v1644 = vpop.f32.mrb[0].mxu0
          %v1645 = vadd.f32 %v1480, %v1644
          %v1646 = vpop.f32.mrb[0].mxu0
          %v1647 = vpop.f32.mrb[0].mxu0
          %v1648 = vadd.f32 %v1480, %v1647
          %v1649 = vpop.f32.mrb[0].mxu0
          %1650 = vmatprep.mubr.bf16.mxu0 0
          %1651 = vmatmul.mubr.bf16.gmra.mrb[0].mxu0 %v1454
          %v1652 = vpop.f32.mrb[0].mxu0
          %v1653 = vadd.f32 %v1480, %v1652
          %v1654 = vpop.f32.mrb[0].mxu0
          %v1655 = vpop.f32.mrb[0].mxu0
          %v1656 = vadd.f32 %v1480, %v1655
          %v1657 = vpop.f32.mrb[0].mxu0
          %1658 = vmatprep.mubr.bf16.mxu0 0
          %1659 = vmatmul.mubr.bf16.gmra.mrb[0].mxu0 %v1455
          %v1660 = vpop.f32.mrb[0].mxu0
          %v1661 = vadd.f32 %v1480, %v1660
          %v1662 = vpop.f32.mrb[0].mxu0
          %v1663 = vpop.f32.mrb[0].mxu0
          %v1664 = vadd.f32 %v1480, %v1663
          %v1665 = vpop.f32.mrb[0].mxu0
          %1666 = vmatprep.mubr.bf16.mxu0 0
          %1667 = vmatmul.mubr.bf16.gmra.mrb[0].mxu0 %v1456
          %v1668 = vpop.f32.mrb[0].mxu0
          %v1669 = vadd.f32 %v1480, %v1668
          %v1670 = vpop.f32.mrb[0].mxu0
          %v1671 = vpop.f32.mrb[0].mxu0
          %v1672 = vadd.f32 %v1480, %v1671
          %v1673 = vpop.f32.mrb[0].mxu0
          %1674 = vmatprep.mubr.bf16.mxu0 0
          %1675 = vmatmul.mubr.bf16.gmra.mrb[0].mxu0 %v1457
          %v1676 = vpop.f32.mrb[0].mxu0
          %v1677 = vadd.f32 %v1480, %v1676
          %v1678 = vpop.f32.mrb[0].mxu0
          %v1679 = vpop.f32.mrb[0].mxu0
          %v1680 = vadd.f32 %v1480, %v1679
          %v1681 = vpop.f32.mrb[0].mxu0
          %1682 = vmatprep.mubr.bf16.mxu0 0
          %1683 = vmatmul.mubr.bf16.gmra.mrb[0].mxu0 %v1458
          %v1684 = vpop.f32.mrb[0].mxu0
          %v1685 = vadd.f32 %v1480, %v1684
          %v1686 = vpop.f32.mrb[0].mxu0
          %v1687 = vpop.f32.mrb[0].mxu0
          %v1688 = vadd.f32 %v1480, %v1687
          %v1689 = vpop.f32.mrb[0].mxu0
          %1690 = vdwg.mxu0
          %v1691 = vmax.f32 %v1565, 0.0
          %v1692 = vmax.f32 %v1568, 0.0
          %v1693 = vmax.f32 %v1573, 0.0
          %v1694 = vmax.f32 %v1576, 0.0
          %v1695 = vmax.f32 %v1581, 0.0
          %v1696 = vmax.f32 %v1584, 0.0
          %v1697 = vmax.f32 %v1589, 0.0
          %v1698 = vmax.f32 %v1592, 0.0
          %v1699 = vmax.f32 %v1597, 0.0
          %v1700 = vmax.f32 %v1600, 0.0
          %v1701 = vmax.f32 %v1605, 0.0
          %v1702 = vmax.f32 %v1608, 0.0
          %v1703 = vmax.f32 %v1613, 0.0
          %v1704 = vmax.f32 %v1616, 0.0
          %v1705 = vmax.f32 %v1621, 0.0
          %v1706 = vmax.f32 %v1624, 0.0
          %v1707 = vmax.f32 %v1629, 0.0
          %v1708 = vmax.f32 %v1632, 0.0
          %v1709 = vmax.f32 %v1637, 0.0
          %v1710 = vmax.f32 %v1640, 0.0
          %v1711 = vmax.f32 %v1645, 0.0
          %v1712 = vmax.f32 %v1648, 0.0
          %v1713 = vmax.f32 %v1653, 0.0
          %v1714 = vmax.f32 %v1656, 0.0
          %v1715 = vmax.f32 %v1661, 0.0
          %v1716 = vmax.f32 %v1664, 0.0
          %v1717 = vmax.f32 %v1669, 0.0
          %v1718 = vmax.f32 %v1672, 0.0
          %v1719 = vmax.f32 %v1677, 0.0
          %v1720 = vmax.f32 %v1680, 0.0
          %v1721 = vmax.f32 %v1685, 0.0
          %v1722 = vmax.f32 %v1688, 0.0
          %v1723 = vpack.c.bf16 %v1692, %v1691
          %v1724 = vpack.c.bf16 %v1694, %v1693
          %v1725 = vpack.c.bf16 %v1696, %v1695
          %v1726 = vpack.c.bf16 %v1698, %v1697
          %v1727 = vpack.c.bf16 %v1700, %v1699
          %v1728 = vpack.c.bf16 %v1702, %v1701
          %v1729 = vpack.c.bf16 %v1704, %v1703
          %v1730 = vpack.c.bf16 %v1706, %v1705
          %v1731 = vpack.c.bf16 %v1708, %v1707
          %v1732 = vpack.c.bf16 %v1710, %v1709
          %v1733 = vpack.c.bf16 %v1712, %v1711
          %v1734 = vpack.c.bf16 %v1714, %v1713
          %v1735 = vpack.c.bf16 %v1716, %v1715
          %v1736 = vpack.c.bf16 %v1718, %v1717
          %v1737 = vpack.c.bf16 %v1720, %v1719
          %v1738 = vpack.c.bf16 %v1722, %v1721
          %v1739 = vld [vmem:[#allocation9] sm:$0xf]
          %v1740 = vld [vmem:[#allocation9 + $0x4] sm:$0xf]
          %v1741 = vld [vmem:[#allocation9 + $0x8] sm:$0xf]
          %v1742 = vld [vmem:[#allocation9 + $0xc] sm:$0xf]
          %v1743 = vld [vmem:[#allocation9 + $0x10] sm:$0xf]
          %v1744 = vld [vmem:[#allocation9 + $0x14] sm:$0xf]
          %v1745 = vld [vmem:[#allocation9 + $0x18] sm:$0xf]
          %v1746 = vld [vmem:[#allocation9 + $0x1c] sm:$0xf]
          %v1747 = vld [vmem:[#allocation9 + $0x20] sm:$0xf]
          %v1748 = vld [vmem:[#allocation9 + $0x24] sm:$0xf]
          %v1749 = vld [vmem:[#allocation9 + $0x28] sm:$0xf]
          %v1750 = vld [vmem:[#allocation9 + $0x2c] sm:$0xf]
          %v1751 = vld [vmem:[#allocation9 + $0x30] sm:$0xf]
          %v1752 = vld [vmem:[#allocation9 + $0x34] sm:$0xf]
          %v1753 = vld [vmem:[#allocation9 + $0x38] sm:$0xf]
          %v1754 = vld [vmem:[#allocation9 + $0x3c] sm:$0xf]
          %v1755 = vld [vmem:[%s6] sm:$0x1]
          %v1757 = vlaneseq
          %v1758 = vshrl.u32 %v1757, 7
          %v1759 = vsub.s32 0, %v1758
          %v1760 = vrot.slane %v1755, %v1759
          %v1778 = vunpack.c.l.b16 %v1739
          %v1779 = vunpack.c.l.b16 %v1740
          %v1780 = vunpack.c.l.b16 %v1741
          %v1781 = vunpack.c.l.b16 %v1742
          %v1782 = vunpack.c.l.b16 %v1743
          %v1783 = vunpack.c.l.b16 %v1744
          %v1784 = vunpack.c.l.b16 %v1745
          %v1785 = vunpack.c.l.b16 %v1746
          %v1786 = vunpack.c.l.b16 %v1747
          %v1787 = vunpack.c.l.b16 %v1748
          %v1788 = vunpack.c.l.b16 %v1749
          %v1789 = vunpack.c.l.b16 %v1750
          %v1790 = vunpack.c.l.b16 %v1751
          %v1791 = vunpack.c.l.b16 %v1752
          %v1792 = vunpack.c.l.b16 %v1753
          %v1793 = vunpack.c.l.b16 %v1754
          %v1794 = vpack.c.b16 %v1779, %v1778
          %v1795 = vpack.c.b16 %v1781, %v1780
          %v1796 = vpack.c.b16 %v1783, %v1782
          %v1797 = vpack.c.b16 %v1785, %v1784
          %v1798 = vpack.c.b16 %v1787, %v1786
          %v1799 = vpack.c.b16 %v1789, %v1788
          %v1800 = vpack.c.b16 %v1791, %v1790
          %v1801 = vpack.c.b16 %v1793, %v1792
          %1810 = vmatprep.subr.bf16.mxu0 0
          %1811 = vmatpush1.bf16.msra.mxu0 %v1794
          %1812 = vmatprep.subr.bf16.mxu0 0
          %1813 = vmatpush1.bf16.msra.mxu0 %v1795
          %1814 = vmatprep.subr.bf16.mxu0 0
          %1815 = vmatpush1.bf16.msra.mxu0 %v1796
          %1816 = vmatprep.subr.bf16.mxu0 0
          %1817 = vmatpush1.bf16.msra.mxu0 %v1797
          %1818 = vmatprep.subr.bf16.mxu0 0
          %1819 = vmatpush1.bf16.msra.mxu0 %v1798
          %1820 = vmatprep.subr.bf16.mxu0 0
          %1821 = vmatpush1.bf16.msra.mxu0 %v1799
          %1822 = vmatprep.subr.bf16.mxu0 0
          %1823 = vmatpush1.bf16.msra.mxu0 %v1800
          %1824 = vmatprep.subr.bf16.mxu0 0
          %1825 = vmatpush1.bf16.msra.mxu0 %v1801
          %1826 = vmatprep.subr.bf16.mxu0 0
          %1827 = vmatpush1.bf16.msra.mxu0 0
          %1828 = vmatprep.subr.bf16.mxu0 0
          %1829 = vmatpush1.bf16.msra.mxu0 0
          %1830 = vmatprep.subr.bf16.mxu0 0
          %1831 = vmatpush1.bf16.msra.mxu0 0
          %1832 = vmatprep.subr.bf16.mxu0 0
          %1833 = vmatpush1.bf16.msra.mxu0 0
          %1834 = vmatprep.subr.bf16.mxu0 0
          %1835 = vmatpush1.bf16.msra.mxu0 0
          %1836 = vmatprep.subr.bf16.mxu0 0
          %1837 = vmatpush1.bf16.msra.mxu0 0
          %1838 = vmatprep.subr.bf16.mxu0 0
          %1839 = vmatpush1.bf16.msra.mxu0 0
          %1840 = vmatprep.subr.bf16.mxu0 0
          %1841 = vmatpush1.bf16.msra.mxu0 0
          %1842 = vmatprep.mubr.bf16.mxu0 0
          %1843 = vmatmul.mubr.bf16.gmra.mrb[0].mxu0 %v1723
          %v1844 = vpop.f32.mrb[0].mxu0
          %v1845 = vadd.f32 %v1760, %v1844
          %v1846 = vpop.f32.mrb[0].mxu0
          %v1847 = vpop.f32.mrb[0].mxu0
          %v1848 = vadd.f32 %v1760, %v1847
          %v1849 = vpop.f32.mrb[0].mxu0
          %1850 = vmatprep.mubr.bf16.mxu0 0
          %1851 = vmatmul.mubr.bf16.gmra.mrb[0].mxu0 %v1724
          %v1852 = vpop.f32.mrb[0].mxu0
          %v1853 = vadd.f32 %v1760, %v1852
          %v1854 = vpop.f32.mrb[0].mxu0
          %v1855 = vpop.f32.mrb[0].mxu0
          %v1856 = vadd.f32 %v1760, %v1855
          %v1857 = vpop.f32.mrb[0].mxu0
          %1858 = vmatprep.mubr.bf16.mxu0 0
          %1859 = vmatmul.mubr.bf16.gmra.mrb[0].mxu0 %v1725
          %v1860 = vpop.f32.mrb[0].mxu0
          %v1861 = vadd.f32 %v1760, %v1860
          %v1862 = vpop.f32.mrb[0].mxu0
          %v1863 = vpop.f32.mrb[0].mxu0
          %v1864 = vadd.f32 %v1760, %v1863
          %v1865 = vpop.f32.mrb[0].mxu0
          %1866 = vmatprep.mubr.bf16.mxu0 0
          %1867 = vmatmul.mubr.bf16.gmra.mrb[0].mxu0 %v1726
          %v1868 = vpop.f32.mrb[0].mxu0
          %v1869 = vadd.f32 %v1760, %v1868
          %v1870 = vpop.f32.mrb[0].mxu0
          %v1871 = vpop.f32.mrb[0].mxu0
          %v1872 = vadd.f32 %v1760, %v1871
          %v1873 = vpop.f32.mrb[0].mxu0
          %1874 = vmatprep.mubr.bf16.mxu0 0
          %1875 = vmatmul.mubr.bf16.gmra.mrb[0].mxu0 %v1727
          %v1876 = vpop.f32.mrb[0].mxu0
          %v1877 = vadd.f32 %v1760, %v1876
          %v1878 = vpop.f32.mrb[0].mxu0
          %v1879 = vpop.f32.mrb[0].mxu0
          %v1880 = vadd.f32 %v1760, %v1879
          %v1881 = vpop.f32.mrb[0].mxu0
          %1882 = vmatprep.mubr.bf16.mxu0 0
          %1883 = vmatmul.mubr.bf16.gmra.mrb[0].mxu0 %v1728
          %v1884 = vpop.f32.mrb[0].mxu0
          %v1885 = vadd.f32 %v1760, %v1884
          %v1886 = vpop.f32.mrb[0].mxu0
          %v1887 = vpop.f32.mrb[0].mxu0
          %v1888 = vadd.f32 %v1760, %v1887
          %v1889 = vpop.f32.mrb[0].mxu0
          %1890 = vmatprep.mubr.bf16.mxu0 0
          %1891 = vmatmul.mubr.bf16.gmra.mrb[0].mxu0 %v1729
          %v1892 = vpop.f32.mrb[0].mxu0
          %v1893 = vadd.f32 %v1760, %v1892
          %v1894 = vpop.f32.mrb[0].mxu0
          %v1895 = vpop.f32.mrb[0].mxu0
          %v1896 = vadd.f32 %v1760, %v1895
          %v1897 = vpop.f32.mrb[0].mxu0
          %1898 = vmatprep.mubr.bf16.mxu0 0
          %1899 = vmatmul.mubr.bf16.gmra.mrb[0].mxu0 %v1730
          %v1900 = vpop.f32.mrb[0].mxu0
          %v1901 = vadd.f32 %v1760, %v1900
          %v1902 = vpop.f32.mrb[0].mxu0
          %v1903 = vpop.f32.mrb[0].mxu0
          %v1904 = vadd.f32 %v1760, %v1903
          %v1905 = vpop.f32.mrb[0].mxu0
          %1906 = vmatprep.mubr.bf16.mxu0 0
          %1907 = vmatmul.mubr.bf16.gmra.mrb[0].mxu0 %v1731
          %v1908 = vpop.f32.mrb[0].mxu0
          %v1909 = vadd.f32 %v1760, %v1908
          %v1910 = vpop.f32.mrb[0].mxu0
          %v1911 = vpop.f32.mrb[0].mxu0
          %v1912 = vadd.f32 %v1760, %v1911
          %v1913 = vpop.f32.mrb[0].mxu0
          %1914 = vmatprep.mubr.bf16.mxu0 0
          %1915 = vmatmul.mubr.bf16.gmra.mrb[0].mxu0 %v1732
          %v1916 = vpop.f32.mrb[0].mxu0
          %v1917 = vadd.f32 %v1760, %v1916
          %v1918 = vpop.f32.mrb[0].mxu0
          %v1919 = vpop.f32.mrb[0].mxu0
          %v1920 = vadd.f32 %v1760, %v1919
          %v1921 = vpop.f32.mrb[0].mxu0
          %1922 = vmatprep.mubr.bf16.mxu0 0
          %1923 = vmatmul.mubr.bf16.gmra.mrb[0].mxu0 %v1733
          %v1924 = vpop.f32.mrb[0].mxu0
          %v1925 = vadd.f32 %v1760, %v1924
          %v1926 = vpop.f32.mrb[0].mxu0
          %v1927 = vpop.f32.mrb[0].mxu0
          %v1928 = vadd.f32 %v1760, %v1927
          %v1929 = vpop.f32.mrb[0].mxu0
          %1930 = vmatprep.mubr.bf16.mxu0 0
          %1931 = vmatmul.mubr.bf16.gmra.mrb[0].mxu0 %v1734
          %v1932 = vpop.f32.mrb[0].mxu0
          %v1933 = vadd.f32 %v1760, %v1932
          %v1934 = vpop.f32.mrb[0].mxu0
          %v1935 = vpop.f32.mrb[0].mxu0
          %v1936 = vadd.f32 %v1760, %v1935
          %v1937 = vpop.f32.mrb[0].mxu0
          %1938 = vmatprep.mubr.bf16.mxu0 0
          %1939 = vmatmul.mubr.bf16.gmra.mrb[0].mxu0 %v1735
          %v1940 = vpop.f32.mrb[0].mxu0
          %v1941 = vadd.f32 %v1760, %v1940
          %v1942 = vpop.f32.mrb[0].mxu0
          %v1943 = vpop.f32.mrb[0].mxu0
          %v1944 = vadd.f32 %v1760, %v1943
          %v1945 = vpop.f32.mrb[0].mxu0
          %1946 = vmatprep.mubr.bf16.mxu0 0
          %1947 = vmatmul.mubr.bf16.gmra.mrb[0].mxu0 %v1736
          %v1948 = vpop.f32.mrb[0].mxu0
          %v1949 = vadd.f32 %v1760, %v1948
          %v1950 = vpop.f32.mrb[0].mxu0
          %v1951 = vpop.f32.mrb[0].mxu0
          %v1952 = vadd.f32 %v1760, %v1951
          %v1953 = vpop.f32.mrb[0].mxu0
          %1954 = vmatprep.mubr.bf16.mxu0 0
          %1955 = vmatmul.mubr.bf16.gmra.mrb[0].mxu0 %v1737
          %v1956 = vpop.f32.mrb[0].mxu0
          %v1957 = vadd.f32 %v1760, %v1956
          %v1958 = vpop.f32.mrb[0].mxu0
          %v1959 = vpop.f32.mrb[0].mxu0
          %v1960 = vadd.f32 %v1760, %v1959
          %v1961 = vpop.f32.mrb[0].mxu0
          %1962 = vmatprep.mubr.bf16.mxu0 0
          %1963 = vmatmul.mubr.bf16.gmra.mrb[0].mxu0 %v1738
          %v1964 = vpop.f32.mrb[0].mxu0
          %v1965 = vadd.f32 %v1760, %v1964
          %v1966 = vpop.f32.mrb[0].mxu0
          %v1967 = vpop.f32.mrb[0].mxu0
          %v1968 = vadd.f32 %v1760, %v1967
          %v1969 = vpop.f32.mrb[0].mxu0
          %1970 = vdwg.mxu0
          %v1971 = vmax.f32 %v1845, 0.0
          %v1972 = vmax.f32 %v1848, 0.0
          %v1973 = vmax.f32 %v1853, 0.0
          %v1974 = vmax.f32 %v1856, 0.0
          %v1975 = vmax.f32 %v1861, 0.0
          %v1976 = vmax.f32 %v1864, 0.0
          %v1977 = vmax.f32 %v1869, 0.0
          %v1978 = vmax.f32 %v1872, 0.0
          %v1979 = vmax.f32 %v1877, 0.0
          %v1980 = vmax.f32 %v1880, 0.0
          %v1981 = vmax.f32 %v1885, 0.0
          %v1982 = vmax.f32 %v1888, 0.0
          %v1983 = vmax.f32 %v1893, 0.0
          %v1984 = vmax.f32 %v1896, 0.0
          %v1985 = vmax.f32 %v1901, 0.0
          %v1986 = vmax.f32 %v1904, 0.0
          %v1987 = vmax.f32 %v1909, 0.0
          %v1988 = vmax.f32 %v1912, 0.0
          %v1989 = vmax.f32 %v1917, 0.0
          %v1990 = vmax.f32 %v1920, 0.0
          %v1991 = vmax.f32 %v1925, 0.0
          %v1992 = vmax.f32 %v1928, 0.0
          %v1993 = vmax.f32 %v1933, 0.0
          %v1994 = vmax.f32 %v1936, 0.0
          %v1995 = vmax.f32 %v1941, 0.0
          %v1996 = vmax.f32 %v1944, 0.0
          %v1997 = vmax.f32 %v1949, 0.0
          %v1998 = vmax.f32 %v1952, 0.0
          %v1999 = vmax.f32 %v1957, 0.0
          %v2000 = vmax.f32 %v1960, 0.0
          %v2001 = vmax.f32 %v1965, 0.0
          %v2002 = vmax.f32 %v1968, 0.0
          %v2003 = vpack.c.bf16 %v1972, %v1971
          %v2004 = vpack.c.bf16 %v1974, %v1973
          %v2005 = vpack.c.bf16 %v1976, %v1975
          %v2006 = vpack.c.bf16 %v1978, %v1977
          %v2007 = vpack.c.bf16 %v1980, %v1979
          %v2008 = vpack.c.bf16 %v1982, %v1981
          %v2009 = vpack.c.bf16 %v1984, %v1983
          %v2010 = vpack.c.bf16 %v1986, %v1985
          %v2011 = vpack.c.bf16 %v1988, %v1987
          %v2012 = vpack.c.bf16 %v1990, %v1989
          %v2013 = vpack.c.bf16 %v1992, %v1991
          %v2014 = vpack.c.bf16 %v1994, %v1993
          %v2015 = vpack.c.bf16 %v1996, %v1995
          %v2016 = vpack.c.bf16 %v1998, %v1997
          %v2017 = vpack.c.bf16 %v2000, %v1999
          %v2018 = vpack.c.bf16 %v2002, %v2001
          %v2035 = vunpack.c.l.b16 %v2003
          %v2036 = vunpack.c.h.b16 %v2003
          %v2037 = vunpack.c.l.b16 %v2004
          %v2038 = vunpack.c.h.b16 %v2004
          %v2039 = vunpack.c.l.b16 %v2005
          %v2040 = vunpack.c.h.b16 %v2005
          %v2041 = vunpack.c.l.b16 %v2006
          %v2042 = vunpack.c.h.b16 %v2006
          %v2043 = vunpack.c.l.b16 %v2007
          %v2044 = vunpack.c.h.b16 %v2007
          %v2045 = vunpack.c.l.b16 %v2008
          %v2046 = vunpack.c.h.b16 %v2008
          %v2047 = vunpack.c.l.b16 %v2009
          %v2048 = vunpack.c.h.b16 %v2009
          %v2049 = vunpack.c.l.b16 %v2010
          %v2050 = vunpack.c.h.b16 %v2010
          %v2051 = vunpack.c.l.b16 %v2011
          %v2052 = vunpack.c.h.b16 %v2011
          %v2053 = vunpack.c.l.b16 %v2012
          %v2054 = vunpack.c.h.b16 %v2012
          %v2055 = vunpack.c.l.b16 %v2013
          %v2056 = vunpack.c.h.b16 %v2013
          %v2057 = vunpack.c.l.b16 %v2014
          %v2058 = vunpack.c.h.b16 %v2014
          %v2059 = vunpack.c.l.b16 %v2015
          %v2060 = vunpack.c.h.b16 %v2015
          %v2061 = vunpack.c.l.b16 %v2016
          %v2062 = vunpack.c.h.b16 %v2016
          %v2063 = vunpack.c.l.b16 %v2017
          %v2064 = vunpack.c.h.b16 %v2017
          %v2065 = vunpack.c.l.b16 %v2018
          %v2066 = vunpack.c.h.b16 %v2018
          %v2067 = vpack.c.b16 %v2035, %v2035
          %v2068 = vpack.c.b16 %v2036, %v2036
          %v2069 = vpack.c.b16 %v2037, %v2037
          %v2070 = vpack.c.b16 %v2038, %v2038
          %v2071 = vpack.c.b16 %v2039, %v2039
          %v2072 = vpack.c.b16 %v2040, %v2040
          %v2073 = vpack.c.b16 %v2041, %v2041
          %v2074 = vpack.c.b16 %v2042, %v2042
          %v2075 = vpack.c.b16 %v2043, %v2043
          %v2076 = vpack.c.b16 %v2044, %v2044
          %v2077 = vpack.c.b16 %v2045, %v2045
          %v2078 = vpack.c.b16 %v2046, %v2046
          %v2079 = vpack.c.b16 %v2047, %v2047
          %v2080 = vpack.c.b16 %v2048, %v2048
          %v2081 = vpack.c.b16 %v2049, %v2049
          %v2082 = vpack.c.b16 %v2050, %v2050
          %v2083 = vpack.c.b16 %v2051, %v2051
          %v2084 = vpack.c.b16 %v2052, %v2052
          %v2085 = vpack.c.b16 %v2053, %v2053
          %v2086 = vpack.c.b16 %v2054, %v2054
          %v2087 = vpack.c.b16 %v2055, %v2055
          %v2088 = vpack.c.b16 %v2056, %v2056
          %v2089 = vpack.c.b16 %v2057, %v2057
          %v2090 = vpack.c.b16 %v2058, %v2058
          %v2091 = vpack.c.b16 %v2059, %v2059
          %v2092 = vpack.c.b16 %v2060, %v2060
          %v2093 = vpack.c.b16 %v2061, %v2061
          %v2094 = vpack.c.b16 %v2062, %v2062
          %v2095 = vpack.c.b16 %v2063, %v2063
          %v2096 = vpack.c.b16 %v2064, %v2064
          %v2097 = vpack.c.b16 %v2065, %v2065
          %v2098 = vpack.c.b16 %v2066, %v2066
          %2131 = vst [vmem:[%s365] sm:$0xf] %v2067
          %2132 = vst [vmem:[%s365 + $0x4] sm:$0xf] %v2068
          %2133 = vst [vmem:[%s365 + $0x8] sm:$0xf] %v2069
          %2134 = vst [vmem:[%s365 + $0xc] sm:$0xf] %v2070
          %2135 = vst [vmem:[%s365 + $0x10] sm:$0xf] %v2071
          %2136 = vst [vmem:[%s365 + $0x14] sm:$0xf] %v2072
          %2137 = vst [vmem:[%s365 + $0x18] sm:$0xf] %v2073
          %2138 = vst [vmem:[%s365 + $0x1c] sm:$0xf] %v2074
          %2139 = vst [vmem:[%s365 + $0x20] sm:$0xf] %v2075
          %2140 = vst [vmem:[%s365 + $0x24] sm:$0xf] %v2076
          %2141 = vst [vmem:[%s365 + $0x28] sm:$0xf] %v2077
          %2142 = vst [vmem:[%s365 + $0x2c] sm:$0xf] %v2078
          %2143 = vst [vmem:[%s365 + $0x30] sm:$0xf] %v2079
          %2144 = vst [vmem:[%s365 + $0x34] sm:$0xf] %v2080
          %2145 = vst [vmem:[%s365 + $0x38] sm:$0xf] %v2081
          %2146 = vst [vmem:[%s365 + $0x3c] sm:$0xf] %v2082
          %2147 = vst [vmem:[%s365 + $0x40] sm:$0xf] %v2083
          %2148 = vst [vmem:[%s365 + $0x44] sm:$0xf] %v2084
          %2149 = vst [vmem:[%s365 + $0x48] sm:$0xf] %v2085
          %2150 = vst [vmem:[%s365 + $0x4c] sm:$0xf] %v2086
          %2151 = vst [vmem:[%s365 + $0x50] sm:$0xf] %v2087
          %2152 = vst [vmem:[%s365 + $0x54] sm:$0xf] %v2088
          %2153 = vst [vmem:[%s365 + $0x58] sm:$0xf] %v2089
          %2154 = vst [vmem:[%s365 + $0x5c] sm:$0xf] %v2090
          %2155 = vst [vmem:[%s365 + $0x60] sm:$0xf] %v2091
          %2156 = vst [vmem:[%s365 + $0x64] sm:$0xf] %v2092
          %2157 = vst [vmem:[%s365 + $0x68] sm:$0xf] %v2093
          %2158 = vst [vmem:[%s365 + $0x6c] sm:$0xf] %v2094
          %2159 = vst [vmem:[%s365 + $0x70] sm:$0xf] %v2095
          %2160 = vst [vmem:[%s365 + $0x74] sm:$0xf] %v2096
          %2161 = vst [vmem:[%s365 + $0x78] sm:$0xf] %v2097
          %2162 = vst [vmem:[%s365 + $0x7c] sm:$0xf] %v2098
        $region72: #{tpu_custom_call.1} parent=47 // pred_fallthru
          _
        %s2163 = sand.u32 %s205, 1
        %s2164 = scalar_lea.sflag [#allocation5], %s2163
        %s2165 = sand.u32 %s205, 1
        %s2166 = smul.addr %s2165, 128
        %s2167 = scalar_lea.vmem [#allocation11], %s2166
        // Predicated region
        $region73: #{tpu_custom_call.1} parent=47 // pred_check
          %p2168 = pneg %p215
        $region74: #{tpu_custom_call.1} parent=47 // pred_check_branch
          %2170 = sbr.rel (%p2168) target = $region76
        $region75: #{tpu_custom_call.1} parent=47 // pred_region
          %s2171 = smul.u32 32, %s30
          %s2173 = ssub.s32 2048, 2048
          %2174 = vsyncadd %s2164, %s2173
          %s2175 = smul.addr %s2171, 64
          %s2176 = scalar_lea.hbm %s7, %s2175
          %s2177 = sshll.u32 %s2167, 4
          %s2178 = int_to_ptr.vmem [resolvable:$true] %s2177
          %2183 = dma.vmem_to_hbm [thread:$0]  %s2178, 2048, %s2176, %s2164, 64, 64, 4
        $region76: #{tpu_custom_call.1} parent=47 // pred_fallthru
          _
      $region48: #{tpu_custom_call.1} parent=5 // pred_fallthru
        _
      %p2184 = scmp.le.s32.totalorder 2, %s21
      // Predicated region
      $region77: #{tpu_custom_call.1} parent=5 // pred_check
        %p2185 = pneg %p2184
      $region78: #{tpu_custom_call.1} parent=5 // pred_check_branch
        %2187 = sbr.rel (%p2185) target = $region80
      $region79: #{tpu_custom_call.1} parent=5 // pred_region
        %s2188 = ssub.s32 %s21, 2
        // Predicated region
        $region81: #{tpu_custom_call.1} parent=79 // pred_check
          %p2189 = pneg %p221
        $region82: #{tpu_custom_call.1} parent=79 // pred_check_branch
          %2191 = sbr.rel (%p2189) target = $region84
        $region83: #{tpu_custom_call.1} parent=79 // pred_region
          %s2192 = sand.u32 %s206, 1
          %s2193 = scalar_lea.sflag [#allocation5], %s2192
          %s2194 = sand.u32 %s206, 1
          %s2195 = smul.addr %s2194, 128
          %s2196 = scalar_lea.vmem [#allocation11], %s2195
          %2197 = dma.done %s2193, 2048
        $region84: #{tpu_custom_call.1} parent=79 // pred_fallthru
          _
      $region80: #{tpu_custom_call.1} parent=5 // pred_fallthru
        _
    $region6: #{tpu_custom_call.1} parent=1 // loop_footer
      %s25 = sadd.s32 1, %s21
    $region7: #{tpu_custom_call.1} parent=1 // loop_footer_branch
      %20 = sbr.rel target = $region3
    $region8: #{tpu_custom_call.1} parent=1 // loop_exit
      _
    %2198 = vsyncpa [#allocation4], 1
    %s2199 = scalar_lea.sflag [#allocation4], 1
    %2200 = vsyncpa %s2199, 1
    %2201 = vsyncpa [#allocation7], 1
    %2202 = vsyncpa [#allocation10], 1
    %2203 = vsyncpa [#allocation5], 1
    %s2204 = scalar_lea.sflag [#allocation5], 1
    %2205 = vsyncpa %s2204, 1

</llo_original>
